<compile_context>
chip_gen: v5e
topology: v5e:2x2
jax: 0.10.0
libtpu: 0.0.40
codegen_flags: <defaults>
</compile_context>

<pallas_src>
import jax
import jax.numpy as jnp
from jax import lax
from jax.experimental import pallas as pl
from jax.experimental.pallas import tpu as pltpu


def songrnn_kernel(seq_ref, emb_ref, wih_ref, whh_ref, b_ref, wlin_ref, blin_ref,
                   out_ref, x1_ref, x_scr, gx_scr):
    """One grid step = one LSTM layer.

    seq_ref : (L,)        token ids (scalar-prefetched, SMEM)
    emb_ref : (V, H)      embedding table (VMEM resident)
    wih_ref : (1, H, 4H)  this layer's input->gates weights, columns [i, f, o, g]
    whh_ref : (1, H, 4H)  this layer's hidden->gates weights, same column order
    b_ref   : (1, 1, 4H)  this layer's b_ih + b_hh, same column order
    wlin_ref: (H, Opad)   output projection weight (pre-transposed, zero-padded)
    blin_ref: (1, Opad)   output projection bias (zero-padded)
    out_ref : (L, Opad)   logits (written on the last layer only)
    x1_ref  : (L, H)      last-layer hidden activations (written on the last layer)
    x_scr   : (L, H)      working buffer: layer input, overwritten in place with output
    gx_scr  : (L, 4H)     hoisted input->gates contribution for this layer
    """
    L, H = x1_ref.shape
    layer = pl.program_id(0)
    last = pl.num_programs(0) - 1

    # Layer 0: fused embedding gather (row loads from the VMEM-resident table).
    @pl.when(layer == 0)
    def _():
        for t in range(L):  # static loop: no carried state, just L row copies
            x_scr[pl.ds(t, 1), :] = emb_ref[pl.ds(seq_ref[t], 1), :]

    wih = wih_ref[0]                                   # (H, 4H)
    whh = whh_ref[0]                                   # (H, 4H)
    b = b_ref[0]                                       # (1, 4H)

    # Hoisted, batched input->gates contribution for every time step of this layer:
    # one lane-dense (L,H)@(H,4H) MXU call instead of L tiny ones.
    gx_scr[...] = jnp.dot(x_scr[...].astype(wih.dtype), wih,
                          preferred_element_type=jnp.float32) + b

    def step(t, carry):
        h, c = carry
        gates = gx_scr[pl.ds(t, 1), :] + jnp.dot(
            h.astype(whh.dtype), whh, preferred_element_type=jnp.float32)   # (1, 4H)
        # Columns pre-permuted to [i, f, o | g] with i/f/o pre-scaled by 0.5, so a
        # single tanh over 4H lanes covers every gate; sigmoid(z) = 0.5*(tanh(z/2)+1).
        y = jnp.tanh(gates)
        ifo = 0.5 * (y[:, :3 * H] + 1.0)
        i_g = ifo[:, 0 * H:1 * H]
        f_g = ifo[:, 1 * H:2 * H]
        o_g = ifo[:, 2 * H:3 * H]
        g_g = y[:, 3 * H:]
        c = f_g * c + i_g * g_g
        h = o_g * jnp.tanh(c)
        # In-place row write: gx_scr already holds x @ wih, so x_scr is free to reuse.
        x_scr[pl.ds(t, 1), :] = h
        return (h, c)

    zeros = jnp.zeros((1, H), jnp.float32)
    lax.fori_loop(0, L, step, (zeros, zeros), unroll=True)

    # Last layer: emit activations + lane-dense output projection.
    # TODO(synk): nn.Dropout is stochastic at train time; eval-mode identity here.
    @pl.when(layer == last)
    def _():
        x = x_scr[...]
        x1_ref[...] = x
        out_ref[...] = (jnp.dot(x.astype(wlin_ref.dtype), wlin_ref[...],
                                preferred_element_type=jnp.float32)
                        + blin_ref[...])


def _vmem_limit_bytes():
    """Generation-aware scoped-VMEM request (v5e/v6e: 128 MiB phys, v7x: 64 MiB)."""
    cap = 128 * 1024 * 1024
    try:
        cap = int(pltpu.get_tpu_info().vmem_capacity_bytes)
    except Exception:
        pass
    # Leave headroom for compiler-internal scratch; never request below the default.
    return int(min(max(cap - 16 * 1024 * 1024, 32 * 1024 * 1024), 100 * 1024 * 1024))


def song_rnn_forward(seq, kparams):
    """Single pallas_call: embedding gather + stacked LSTM + output projection."""
    emb = kparams["embedding"]           # (V, H)
    wih_t = kparams["wih_t"]             # (NL, H, 4H)
    whh_t = kparams["whh_t"]             # (NL, H, 4H)
    bias = kparams["bias"]               # (NL, 1, 4H)
    wlin_t = kparams["wlin_t"]           # (H, Opad)
    blin = kparams["blin"]               # (1, Opad)
    O = kparams["output_size"]

    NL, H, H4 = wih_t.shape
    V = emb.shape[0]
    O_pad = wlin_t.shape[1]
    L = seq.shape[0]

    grid_spec = pltpu.PrefetchScalarGridSpec(
        num_scalar_prefetch=1,                         # seq ids -> SMEM
        grid=(NL,),                                    # one grid step per layer
        in_specs=[
            pl.BlockSpec((V, H), lambda l, s: (0, 0)),          # embedding (resident)
            pl.BlockSpec((1, H, H4), lambda l, s: (l, 0, 0)),   # wih (streamed/layer)
            pl.BlockSpec((1, H, H4), lambda l, s: (l, 0, 0)),   # whh (streamed/layer)
            pl.BlockSpec((1, 1, H4), lambda l, s: (l, 0, 0)),   # bias (streamed/layer)
            pl.BlockSpec((H, O_pad), lambda l, s: (0, 0)),      # wlin (resident)
            pl.BlockSpec((1, O_pad), lambda l, s: (0, 0)),      # blin (resident)
        ],
        out_specs=(
            pl.BlockSpec((L, O_pad), lambda l, s: (0, 0)),      # logits
            pl.BlockSpec((L, H), lambda l, s: (0, 0)),          # activations
        ),
        scratch_shapes=[
            pltpu.VMEM((L, H), jnp.float32),     # x working buffer (persists across layers)
            pltpu.VMEM((L, H4), jnp.float32),    # hoisted input->gates staging
        ],
    )

    out, x1 = pl.pallas_call(
        songrnn_kernel,
        out_shape=(jax.ShapeDtypeStruct((L, O_pad), jnp.float32),
                   jax.ShapeDtypeStruct((L, H), jnp.float32)),
        grid_spec=grid_spec,
        compiler_params=pltpu.CompilerParams(
            dimension_semantics=("arbitrary",),        # layers are sequential
            vmem_limit_bytes=_vmem_limit_bytes()),
    )(seq, emb, wih_t, whh_t, bias, wlin_t, blin)

    return out[:, :O], x1


def init_params(key, input_size, hidden_size, output_size, num_layers):
    """Deterministic synthetic params in PyTorch-canonical layout (gate order i,f,g,o)."""
    keys = jax.random.split(key, 3 + 4 * num_layers)
    k_iter = iter(keys)
    H = hidden_size
    bound = 1.0 / jnp.sqrt(H)

    emb = jax.random.normal(next(k_iter), (input_size, H), jnp.float32)

    lstm = []
    for _ in range(num_layers):
        w_ih = jax.random.uniform(next(k_iter), (4 * H, H), jnp.float32, -bound, bound)
        w_hh = jax.random.uniform(next(k_iter), (4 * H, H), jnp.float32, -bound, bound)
        b_ih = jax.random.uniform(next(k_iter), (4 * H,), jnp.float32, -bound, bound)
        b_hh = jax.random.uniform(next(k_iter), (4 * H,), jnp.float32, -bound, bound)
        lstm.append((w_ih, w_hh, b_ih, b_hh))

    w_lin = jax.random.uniform(next(k_iter), (output_size, H), jnp.float32, -bound, bound)
    b_lin = jax.random.uniform(next(k_iter), (output_size,), jnp.float32, -bound, bound)

    return {"embedding": emb, "lstm": lstm, "w_lin": w_lin, "b_lin": b_lin}


def prepare_kernel_params(params, weight_dtype=jnp.float32):
    """Repack PyTorch-layout params into the kernel layout.

    * Gate blocks permuted from PyTorch order (i, f, g, o) to (i, f, o, g).
    * The i/f/o (sigmoid) columns of wih/whh/bias are pre-scaled by 0.5 so the
      kernel evaluates all gates with one tanh: sigmoid(z) = 0.5*(tanh(z/2)+1).
    * Weights pre-transposed to (H, 4H) / (H, O); output dim zero-padded to a
      multiple of 128 for lane-dense stores.
    * weight_dtype=jnp.bfloat16 recommended on v6e/v7x at production H (halves
      weight bytes, matches bf16 MXU); f32 default keeps tight tolerances here.
    """
    wih_t, whh_t, bias = [], [], []
    for (w_ih, w_hh, b_ih, b_hh) in params["lstm"]:
        wi, wf, wg, wo = jnp.split(w_ih, 4, axis=0)
        hi, hf, hg, ho = jnp.split(w_hh, 4, axis=0)
        bi, bf, bg, bo = jnp.split(b_ih + b_hh, 4)
        wih_t.append(jnp.concatenate([0.5 * wi, 0.5 * wf, 0.5 * wo, wg], axis=0).T)
        whh_t.append(jnp.concatenate([0.5 * hi, 0.5 * hf, 0.5 * ho, hg], axis=0).T)
        bias.append(jnp.concatenate([0.5 * bi, 0.5 * bf, 0.5 * bo, bg])[None, :])

    O = params["w_lin"].shape[0]
    O_pad = ((O + 127) // 128) * 128
    wlin = jnp.pad(params["w_lin"].T, ((0, 0), (0, O_pad - O)))      # (H, Opad)
    blin = jnp.pad(params["b_lin"], (0, O_pad - O))[None, :]         # (1, Opad)

    return {
        "embedding": params["embedding"].astype(jnp.float32),
        "wih_t": jnp.stack(wih_t).astype(weight_dtype),   # (NL, H, 4H)
        "whh_t": jnp.stack(whh_t).astype(weight_dtype),   # (NL, H, 4H)
        "bias": jnp.stack(bias).astype(jnp.float32),      # (NL, 1, 4H), added in f32
        "wlin_t": wlin.astype(weight_dtype),               # (H, Opad)
        "blin": blin.astype(jnp.float32),                  # (1, Opad)
        "output_size": O,
    }


def reference_forward(seq, params):
    """Pure-JAX reference mirroring torch.nn.LSTM eval semantics (gate order i,f,g,o)."""
    x = jnp.take(params["embedding"], seq, axis=0)    # (L, H)
    H = params["embedding"].shape[1]
    for (w_ih, w_hh, b_ih, b_hh) in params["lstm"]:
        def step(carry, x_t, w_ih=w_ih, w_hh=w_hh, b=b_ih + b_hh):
            h, c = carry
            gates = w_ih @ x_t + w_hh @ h + b
            i_g = jax.nn.sigmoid(gates[0 * H:1 * H])
            f_g = jax.nn.sigmoid(gates[1 * H:2 * H])
            g_g = jnp.tanh(gates[2 * H:3 * H])
            o_g = jax.nn.sigmoid(gates[3 * H:4 * H])
            c_new = f_g * c + i_g * g_g
            h_new = o_g * jnp.tanh(c_new)
            return (h_new, c_new), h_new

        (_, _), x = lax.scan(step, (jnp.zeros(H), jnp.zeros(H)), x)
    out = x @ params["w_lin"].T + params["b_lin"]
    return out, x


if __name__ == "__main__":
    # Small shapes consistent with the module: character-level vocab, stacked LSTM.
    INPUT_SIZE = 64      # vocab size
    OUTPUT_SIZE = 64
    HIDDEN_SIZE = 32
    NUM_LAYERS = 2
    SEQ_LEN = 8

    key = jax.random.PRNGKey(0)
    k_param, k_seq = jax.random.split(key)
    params = init_params(k_param, INPUT_SIZE, HIDDEN_SIZE, OUTPUT_SIZE, NUM_LAYERS)
    kparams = prepare_kernel_params(params)        # f32; use weight_dtype=bf16 on v6e/v7x
    seq = jax.random.randint(k_seq, (SEQ_LEN,), 0, INPUT_SIZE, dtype=jnp.int32)

    out, acts = song_rnn_forward(seq, kparams)
    jax.block_until_ready((out, acts))

    ref_out, ref_acts = reference_forward(seq, params)
    assert out.shape == (SEQ_LEN, OUTPUT_SIZE)
    assert acts.shape == (SEQ_LEN, HIDDEN_SIZE)
    assert jnp.allclose(out, ref_out, atol=1e-4, rtol=1e-4)
    assert jnp.allclose(acts, ref_acts, atol=1e-4, rtol=1e-4)

    print("KERNEL_OK")
</pallas_src>

<mosaic_0001>
module attributes {stable_mosaic.version = 11 : i64} {
  func.func @songrnn_kernel(%arg0: i32, %arg1: memref<8xi32, #tpu.memory_space<smem>>, %arg2: memref<64x32xf32, #tpu.memory_space<vmem>>, %arg3: memref<1x32x128xf32, #tpu.memory_space<vmem>>, %arg4: memref<1x32x128xf32, #tpu.memory_space<vmem>>, %arg5: memref<1x1x128xf32, #tpu.memory_space<vmem>>, %arg6: memref<32x128xf32, #tpu.memory_space<vmem>>, %arg7: memref<1x128xf32, #tpu.memory_space<vmem>>, %arg8: memref<8x128xf32, #tpu.memory_space<vmem>>, %arg9: memref<8x32xf32, #tpu.memory_space<vmem>>, %arg10: memref<8x32xf32, #tpu.memory_space<vmem>>, %arg11: memref<8x128xf32, #tpu.memory_space<vmem>>) attributes {dimension_semantics = [#tpu.dimension_semantics<arbitrary>], iteration_bounds = array<i64: 2>, scalar_prefetch = 1 : i64, scratch_operands = 2 : i64, tpu.core_type = #tpu.core_type<tc>, window_params = [{pipeline_mode = #tpu.pipeline_mode<synchronous>, transform_indices = @transform_0, window_bounds = array<i64: 64, 32>}, {transform_indices = @transform_1, window_bounds = array<i64: 1, 32, 128>}, {transform_indices = @transform_2, window_bounds = array<i64: 1, 32, 128>}, {transform_indices = @transform_3, window_bounds = array<i64: 1, 1, 128>}, {pipeline_mode = #tpu.pipeline_mode<synchronous>, transform_indices = @transform_4, window_bounds = array<i64: 32, 128>}, {pipeline_mode = #tpu.pipeline_mode<synchronous>, transform_indices = @transform_5, window_bounds = array<i64: 1, 128>}, {pipeline_mode = #tpu.pipeline_mode<synchronous>, transform_indices = @transform_6, window_bounds = array<i64: 8, 128>}, {pipeline_mode = #tpu.pipeline_mode<synchronous>, transform_indices = @transform_7, window_bounds = array<i64: 8, 32>}]} {
    %c0_i32 = arith.constant 0 : i32
    %0 = arith.cmpi eq, %arg0, %c0_i32 : i32
    %1 = arith.extui %0 : i1 to i32
    %c0_i32_0 = arith.constant 0 : i32
    %2 = arith.cmpi ne, %1, %c0_i32_0 : i32
    scf.if %2 {
      %c0_57 = arith.constant 0 : index
      %186 = memref.load %arg1[%c0_57] : memref<8xi32, #tpu.memory_space<smem>>
      %187 = arith.index_cast %186 : i32 to index
      %c0_58 = arith.constant 0 : index
      %188 = vector.load %arg2[%187, %c0_58] : memref<64x32xf32, #tpu.memory_space<vmem>>, vector<1x32xf32>
      %c0_59 = arith.constant 0 : index
      %c0_60 = arith.constant 0 : index
      %189 = vector.load %arg10[%c0_59, %c0_60] : memref<8x32xf32, #tpu.memory_space<vmem>>, vector<1x32xf32>
      tpu.vector_store %arg10[%c0_59, %c0_60], %188 {strides = array<i32>} : memref<8x32xf32, #tpu.memory_space<vmem>>, vector<1x32xf32>,
      %c1 = arith.constant 1 : index
      %190 = memref.load %arg1[%c1] : memref<8xi32, #tpu.memory_space<smem>>
      %191 = arith.index_cast %190 : i32 to index
      %c0_61 = arith.constant 0 : index
      %192 = vector.load %arg2[%191, %c0_61] : memref<64x32xf32, #tpu.memory_space<vmem>>, vector<1x32xf32>
      %c1_62 = arith.constant 1 : index
      %c0_63 = arith.constant 0 : index
      %193 = vector.load %arg10[%c1_62, %c0_63] : memref<8x32xf32, #tpu.memory_space<vmem>>, vector<1x32xf32>
      tpu.vector_store %arg10[%c1_62, %c0_63], %192 {strides = array<i32>} : memref<8x32xf32, #tpu.memory_space<vmem>>, vector<1x32xf32>,
      %c2 = arith.constant 2 : index
      %194 = memref.load %arg1[%c2] : memref<8xi32, #tpu.memory_space<smem>>
      %195 = arith.index_cast %194 : i32 to index
      %c0_64 = arith.constant 0 : index
      %196 = vector.load %arg2[%195, %c0_64] : memref<64x32xf32, #tpu.memory_space<vmem>>, vector<1x32xf32>
      %c2_65 = arith.constant 2 : index
      %c0_66 = arith.constant 0 : index
      %197 = vector.load %arg10[%c2_65, %c0_66] : memref<8x32xf32, #tpu.memory_space<vmem>>, vector<1x32xf32>
      tpu.vector_store %arg10[%c2_65, %c0_66], %196 {strides = array<i32>} : memref<8x32xf32, #tpu.memory_space<vmem>>, vector<1x32xf32>,
      %c3 = arith.constant 3 : index
      %198 = memref.load %arg1[%c3] : memref<8xi32, #tpu.memory_space<smem>>
      %199 = arith.index_cast %198 : i32 to index
      %c0_67 = arith.constant 0 : index
      %200 = vector.load %arg2[%199, %c0_67] : memref<64x32xf32, #tpu.memory_space<vmem>>, vector<1x32xf32>
      %c3_68 = arith.constant 3 : index
      %c0_69 = arith.constant 0 : index
      %201 = vector.load %arg10[%c3_68, %c0_69] : memref<8x32xf32, #tpu.memory_space<vmem>>, vector<1x32xf32>
      tpu.vector_store %arg10[%c3_68, %c0_69], %200 {strides = array<i32>} : memref<8x32xf32, #tpu.memory_space<vmem>>, vector<1x32xf32>,
      %c4 = arith.constant 4 : index
      %202 = memref.load %arg1[%c4] : memref<8xi32, #tpu.memory_space<smem>>
      %203 = arith.index_cast %202 : i32 to index
      %c0_70 = arith.constant 0 : index
      %204 = vector.load %arg2[%203, %c0_70] : memref<64x32xf32, #tpu.memory_space<vmem>>, vector<1x32xf32>
      %c4_71 = arith.constant 4 : index
      %c0_72 = arith.constant 0 : index
      %205 = vector.load %arg10[%c4_71, %c0_72] : memref<8x32xf32, #tpu.memory_space<vmem>>, vector<1x32xf32>
      tpu.vector_store %arg10[%c4_71, %c0_72], %204 {strides = array<i32>} : memref<8x32xf32, #tpu.memory_space<vmem>>, vector<1x32xf32>,
      %c5 = arith.constant 5 : index
      %206 = memref.load %arg1[%c5] : memref<8xi32, #tpu.memory_space<smem>>
      %207 = arith.index_cast %206 : i32 to index
      %c0_73 = arith.constant 0 : index
      %208 = vector.load %arg2[%207, %c0_73] : memref<64x32xf32, #tpu.memory_space<vmem>>, vector<1x32xf32>
      %c5_74 = arith.constant 5 : index
      %c0_75 = arith.constant 0 : index
      %209 = vector.load %arg10[%c5_74, %c0_75] : memref<8x32xf32, #tpu.memory_space<vmem>>, vector<1x32xf32>
      tpu.vector_store %arg10[%c5_74, %c0_75], %208 {strides = array<i32>} : memref<8x32xf32, #tpu.memory_space<vmem>>, vector<1x32xf32>,
      %c6 = arith.constant 6 : index
      %210 = memref.load %arg1[%c6] : memref<8xi32, #tpu.memory_space<smem>>
      %211 = arith.index_cast %210 : i32 to index
      %c0_76 = arith.constant 0 : index
      %212 = vector.load %arg2[%211, %c0_76] : memref<64x32xf32, #tpu.memory_space<vmem>>, vector<1x32xf32>
      %c6_77 = arith.constant 6 : index
      %c0_78 = arith.constant 0 : index
      %213 = vector.load %arg10[%c6_77, %c0_78] : memref<8x32xf32, #tpu.memory_space<vmem>>, vector<1x32xf32>
      tpu.vector_store %arg10[%c6_77, %c0_78], %212 {strides = array<i32>} : memref<8x32xf32, #tpu.memory_space<vmem>>, vector<1x32xf32>,
      %c7 = arith.constant 7 : index
      %214 = memref.load %arg1[%c7] : memref<8xi32, #tpu.memory_space<smem>>
      %215 = arith.index_cast %214 : i32 to index
      %c0_79 = arith.constant 0 : index
      %216 = vector.load %arg2[%215, %c0_79] : memref<64x32xf32, #tpu.memory_space<vmem>>, vector<1x32xf32>
      %c7_80 = arith.constant 7 : index
      %c0_81 = arith.constant 0 : index
      %217 = vector.load %arg10[%c7_80, %c0_81] : memref<8x32xf32, #tpu.memory_space<vmem>>, vector<1x32xf32>
      tpu.vector_store %arg10[%c7_80, %c0_81], %216 {strides = array<i32>} : memref<8x32xf32, #tpu.memory_space<vmem>>, vector<1x32xf32>,
    } else {
    }
    %c0 = arith.constant 0 : index
    %c0_1 = arith.constant 0 : index
    %c0_2 = arith.constant 0 : index
    %3 = vector.load %arg3[%c0, %c0_1, %c0_2] : memref<1x32x128xf32, #tpu.memory_space<vmem>>, vector<1x32x128xf32>
    %4 = vector.shape_cast %3 : vector<1x32x128xf32> to vector<32x128xf32>
    %c0_3 = arith.constant 0 : index
    %c0_4 = arith.constant 0 : index
    %c0_5 = arith.constant 0 : index
    %5 = vector.load %arg4[%c0_3, %c0_4, %c0_5] : memref<1x32x128xf32, #tpu.memory_space<vmem>>, vector<1x32x128xf32>
    %6 = vector.shape_cast %5 : vector<1x32x128xf32> to vector<32x128xf32>
    %c0_6 = arith.constant 0 : index
    %c0_7 = arith.constant 0 : index
    %c0_8 = arith.constant 0 : index
    %7 = vector.load %arg5[%c0_6, %c0_7, %c0_8] : memref<1x1x128xf32, #tpu.memory_space<vmem>>, vector<1x1x128xf32>
    %8 = vector.shape_cast %7 : vector<1x1x128xf32> to vector<1x128xf32>
    %c0_9 = arith.constant 0 : index
    %c0_10 = arith.constant 0 : index
    %9 = vector.load %arg10[%c0_9, %c0_10] : memref<8x32xf32, #tpu.memory_space<vmem>>, vector<8x32xf32>
    %cst = arith.constant dense<0.000000e+00> : vector<8x128xf32>
    %10 = tpu.matmul %9, %4, %cst {dimension_numbers = #tpu.dot_dimension_numbers<[1], [0], [0], [1], [0, 0, 1, 1], [], []>} : vector<8x32xf32>, vector<32x128xf32>, vector<8x128xf32> -> vector<8x128xf32>
    %11 = vector.broadcast %8 : vector<1x128xf32> to vector<8x128xf32>
    %12 = arith.addf %10, %11 : vector<8x128xf32>
    %c0_11 = arith.constant 0 : index
    %c0_12 = arith.constant 0 : index
    %13 = vector.load %arg11[%c0_11, %c0_12] : memref<8x128xf32, #tpu.memory_space<vmem>>, vector<8x128xf32>
    tpu.vector_store %arg11[%c0_11, %c0_12], %12 {strides = array<i32>} : memref<8x128xf32, #tpu.memory_space<vmem>>, vector<8x128xf32>,
    %cst_13 = arith.constant 0.000000e+00 : f32
    %14 = vector.broadcast %cst_13 : f32 to vector<1x32xf32>
    %c0_i32_14 = arith.constant 0 : i32
    %15 = arith.index_cast %c0_i32_14 : i32 to index
    %c0_15 = arith.constant 0 : index
    %16 = vector.load %arg11[%15, %c0_15] : memref<8x128xf32, #tpu.memory_space<vmem>>, vector<1x128xf32>
    %cst_16 = arith.constant dense<0.000000e+00> : vector<1x128xf32>
    %17 = tpu.matmul %14, %6, %cst_16 {dimension_numbers = #tpu.dot_dimension_numbers<[1], [0], [0], [1], [0, 0, 1, 1], [], []>} : vector<1x32xf32>, vector<32x128xf32>, vector<1x128xf32> -> vector<1x128xf32>
    %18 = arith.addf %16, %17 : vector<1x128xf32>
    %19 = math.tanh %18 : vector<1x128xf32>
    %20 = vector.extract_strided_slice %19 {offsets = [0, 0], sizes = [1, 96], strides = [1, 1]} : vector<1x128xf32> to vector<1x96xf32>
    %cst_17 = arith.constant 1.000000e+00 : f32
    %21 = vector.broadcast %cst_17 : f32 to vector<1x96xf32>
    %22 = arith.addf %20, %21 : vector<1x96xf32>
    %cst_18 = arith.constant 5.000000e-01 : f32
    %23 = vector.broadcast %cst_18 : f32 to vector<1x96xf32>
    %24 = arith.mulf %23, %22 : vector<1x96xf32>
    %25 = vector.extract_strided_slice %24 {offsets = [0, 0], sizes = [1, 32], strides = [1, 1]} : vector<1x96xf32> to vector<1x32xf32>
    %26 = vector.extract_strided_slice %24 {offsets = [0, 32], sizes = [1, 32], strides = [1, 1]} : vector<1x96xf32> to vector<1x32xf32>
    %27 = vector.extract_strided_slice %24 {offsets = [0, 64], sizes = [1, 32], strides = [1, 1]} : vector<1x96xf32> to vector<1x32xf32>
    %28 = vector.extract_strided_slice %19 {offsets = [0, 96], sizes = [1, 32], strides = [1, 1]} : vector<1x128xf32> to vector<1x32xf32>
    %29 = arith.mulf %26, %14 : vector<1x32xf32>
    %30 = arith.mulf %25, %28 : vector<1x32xf32>
    %31 = arith.addf %29, %30 : vector<1x32xf32>
    %32 = math.tanh %31 : vector<1x32xf32>
    %33 = arith.mulf %27, %32 : vector<1x32xf32>
    %34 = arith.index_cast %c0_i32_14 : i32 to index
    %c0_19 = arith.constant 0 : index
    %35 = vector.load %arg10[%34, %c0_19] : memref<8x32xf32, #tpu.memory_space<vmem>>, vector<1x32xf32>
    tpu.vector_store %arg10[%34, %c0_19], %33 {strides = array<i32>} : memref<8x32xf32, #tpu.memory_space<vmem>>, vector<1x32xf32>,
    %c1_i32 = arith.constant 1 : i32
    %36 = arith.index_cast %c1_i32 : i32 to index
    %c0_20 = arith.constant 0 : index
    %37 = vector.load %arg11[%36, %c0_20] : memref<8x128xf32, #tpu.memory_space<vmem>>, vector<1x128xf32>
    %cst_21 = arith.constant dense<0.000000e+00> : vector<1x128xf32>
    %38 = tpu.matmul %33, %6, %cst_21 {dimension_numbers = #tpu.dot_dimension_numbers<[1], [0], [0], [1], [0, 0, 1, 1], [], []>} : vector<1x32xf32>, vector<32x128xf32>, vector<1x128xf32> -> vector<1x128xf32>
    %39 = arith.addf %37, %38 : vector<1x128xf32>
    %40 = math.tanh %39 : vector<1x128xf32>
    %41 = vector.extract_strided_slice %40 {offsets = [0, 0], sizes = [1, 96], strides = [1, 1]} : vector<1x128xf32> to vector<1x96xf32>
    %cst_22 = arith.constant 1.000000e+00 : f32
    %42 = vector.broadcast %cst_22 : f32 to vector<1x96xf32>
    %43 = arith.addf %41, %42 : vector<1x96xf32>
    %cst_23 = arith.constant 5.000000e-01 : f32
    %44 = vector.broadcast %cst_23 : f32 to vector<1x96xf32>
    %45 = arith.mulf %44, %43 : vector<1x96xf32>
    %46 = vector.extract_strided_slice %45 {offsets = [0, 0], sizes = [1, 32], strides = [1, 1]} : vector<1x96xf32> to vector<1x32xf32>
    %47 = vector.extract_strided_slice %45 {offsets = [0, 32], sizes = [1, 32], strides = [1, 1]} : vector<1x96xf32> to vector<1x32xf32>
    %48 = vector.extract_strided_slice %45 {offsets = [0, 64], sizes = [1, 32], strides = [1, 1]} : vector<1x96xf32> to vector<1x32xf32>
    %49 = vector.extract_strided_slice %40 {offsets = [0, 96], sizes = [1, 32], strides = [1, 1]} : vector<1x128xf32> to vector<1x32xf32>
    %50 = arith.mulf %47, %31 : vector<1x32xf32>
    %51 = arith.mulf %46, %49 : vector<1x32xf32>
    %52 = arith.addf %50, %51 : vector<1x32xf32>
    %53 = math.tanh %52 : vector<1x32xf32>
    %54 = arith.mulf %48, %53 : vector<1x32xf32>
    %55 = arith.index_cast %c1_i32 : i32 to index
    %c0_24 = arith.constant 0 : index
    %56 = vector.load %arg10[%55, %c0_24] : memref<8x32xf32, #tpu.memory_space<vmem>>, vector<1x32xf32>
    tpu.vector_store %arg10[%55, %c0_24], %54 {strides = array<i32>} : memref<8x32xf32, #tpu.memory_space<vmem>>, vector<1x32xf32>,
    %c2_i32 = arith.constant 2 : i32
    %57 = arith.index_cast %c2_i32 : i32 to index
    %c0_25 = arith.constant 0 : index
    %58 = vector.load %arg11[%57, %c0_25] : memref<8x128xf32, #tpu.memory_space<vmem>>, vector<1x128xf32>
    %cst_26 = arith.constant dense<0.000000e+00> : vector<1x128xf32>
    %59 = tpu.matmul %54, %6, %cst_26 {dimension_numbers = #tpu.dot_dimension_numbers<[1], [0], [0], [1], [0, 0, 1, 1], [], []>} : vector<1x32xf32>, vector<32x128xf32>, vector<1x128xf32> -> vector<1x128xf32>
    %60 = arith.addf %58, %59 : vector<1x128xf32>
    %61 = math.tanh %60 : vector<1x128xf32>
    %62 = vector.extract_strided_slice %61 {offsets = [0, 0], sizes = [1, 96], strides = [1, 1]} : vector<1x128xf32> to vector<1x96xf32>
    %cst_27 = arith.constant 1.000000e+00 : f32
    %63 = vector.broadcast %cst_27 : f32 to vector<1x96xf32>
    %64 = arith.addf %62, %63 : vector<1x96xf32>
    %cst_28 = arith.constant 5.000000e-01 : f32
    %65 = vector.broadcast %cst_28 : f32 to vector<1x96xf32>
    %66 = arith.mulf %65, %64 : vector<1x96xf32>
    %67 = vector.extract_strided_slice %66 {offsets = [0, 0], sizes = [1, 32], strides = [1, 1]} : vector<1x96xf32> to vector<1x32xf32>
    %68 = vector.extract_strided_slice %66 {offsets = [0, 32], sizes = [1, 32], strides = [1, 1]} : vector<1x96xf32> to vector<1x32xf32>
    %69 = vector.extract_strided_slice %66 {offsets = [0, 64], sizes = [1, 32], strides = [1, 1]} : vector<1x96xf32> to vector<1x32xf32>
    %70 = vector.extract_strided_slice %61 {offsets = [0, 96], sizes = [1, 32], strides = [1, 1]} : vector<1x128xf32> to vector<1x32xf32>
    %71 = arith.mulf %68, %52 : vector<1x32xf32>
    %72 = arith.mulf %67, %70 : vector<1x32xf32>
    %73 = arith.addf %71, %72 : vector<1x32xf32>
    %74 = math.tanh %73 : vector<1x32xf32>
    %75 = arith.mulf %69, %74 : vector<1x32xf32>
    %76 = arith.index_cast %c2_i32 : i32 to index
    %c0_29 = arith.constant 0 : index
    %77 = vector.load %arg10[%76, %c0_29] : memref<8x32xf32, #tpu.memory_space<vmem>>, vector<1x32xf32>
    tpu.vector_store %arg10[%76, %c0_29], %75 {strides = array<i32>} : memref<8x32xf32, #tpu.memory_space<vmem>>, vector<1x32xf32>,
    %c3_i32 = arith.constant 3 : i32
    %78 = arith.index_cast %c3_i32 : i32 to index
    %c0_30 = arith.constant 0 : index
    %79 = vector.load %arg11[%78, %c0_30] : memref<8x128xf32, #tpu.memory_space<vmem>>, vector<1x128xf32>
    %cst_31 = arith.constant dense<0.000000e+00> : vector<1x128xf32>
    %80 = tpu.matmul %75, %6, %cst_31 {dimension_numbers = #tpu.dot_dimension_numbers<[1], [0], [0], [1], [0, 0, 1, 1], [], []>} : vector<1x32xf32>, vector<32x128xf32>, vector<1x128xf32> -> vector<1x128xf32>
    %81 = arith.addf %79, %80 : vector<1x128xf32>
    %82 = math.tanh %81 : vector<1x128xf32>
    %83 = vector.extract_strided_slice %82 {offsets = [0, 0], sizes = [1, 96], strides = [1, 1]} : vector<1x128xf32> to vector<1x96xf32>
    %cst_32 = arith.constant 1.000000e+00 : f32
    %84 = vector.broadcast %cst_32 : f32 to vector<1x96xf32>
    %85 = arith.addf %83, %84 : vector<1x96xf32>
    %cst_33 = arith.constant 5.000000e-01 : f32
    %86 = vector.broadcast %cst_33 : f32 to vector<1x96xf32>
    %87 = arith.mulf %86, %85 : vector<1x96xf32>
    %88 = vector.extract_strided_slice %87 {offsets = [0, 0], sizes = [1, 32], strides = [1, 1]} : vector<1x96xf32> to vector<1x32xf32>
    %89 = vector.extract_strided_slice %87 {offsets = [0, 32], sizes = [1, 32], strides = [1, 1]} : vector<1x96xf32> to vector<1x32xf32>
    %90 = vector.extract_strided_slice %87 {offsets = [0, 64], sizes = [1, 32], strides = [1, 1]} : vector<1x96xf32> to vector<1x32xf32>
    %91 = vector.extract_strided_slice %82 {offsets = [0, 96], sizes = [1, 32], strides = [1, 1]} : vector<1x128xf32> to vector<1x32xf32>
    %92 = arith.mulf %89, %73 : vector<1x32xf32>
    %93 = arith.mulf %88, %91 : vector<1x32xf32>
    %94 = arith.addf %92, %93 : vector<1x32xf32>
    %95 = math.tanh %94 : vector<1x32xf32>
    %96 = arith.mulf %90, %95 : vector<1x32xf32>
    %97 = arith.index_cast %c3_i32 : i32 to index
    %c0_34 = arith.constant 0 : index
    %98 = vector.load %arg10[%97, %c0_34] : memref<8x32xf32, #tpu.memory_space<vmem>>, vector<1x32xf32>
    tpu.vector_store %arg10[%97, %c0_34], %96 {strides = array<i32>} : memref<8x32xf32, #tpu.memory_space<vmem>>, vector<1x32xf32>,
    %c4_i32 = arith.constant 4 : i32
    %99 = arith.index_cast %c4_i32 : i32 to index
    %c0_35 = arith.constant 0 : index
    %100 = vector.load %arg11[%99, %c0_35] : memref<8x128xf32, #tpu.memory_space<vmem>>, vector<1x128xf32>
    %cst_36 = arith.constant dense<0.000000e+00> : vector<1x128xf32>
    %101 = tpu.matmul %96, %6, %cst_36 {dimension_numbers = #tpu.dot_dimension_numbers<[1], [0], [0], [1], [0, 0, 1, 1], [], []>} : vector<1x32xf32>, vector<32x128xf32>, vector<1x128xf32> -> vector<1x128xf32>
    %102 = arith.addf %100, %101 : vector<1x128xf32>
    %103 = math.tanh %102 : vector<1x128xf32>
    %104 = vector.extract_strided_slice %103 {offsets = [0, 0], sizes = [1, 96], strides = [1, 1]} : vector<1x128xf32> to vector<1x96xf32>
    %cst_37 = arith.constant 1.000000e+00 : f32
    %105 = vector.broadcast %cst_37 : f32 to vector<1x96xf32>
    %106 = arith.addf %104, %105 : vector<1x96xf32>
    %cst_38 = arith.constant 5.000000e-01 : f32
    %107 = vector.broadcast %cst_38 : f32 to vector<1x96xf32>
    %108 = arith.mulf %107, %106 : vector<1x96xf32>
    %109 = vector.extract_strided_slice %108 {offsets = [0, 0], sizes = [1, 32], strides = [1, 1]} : vector<1x96xf32> to vector<1x32xf32>
    %110 = vector.extract_strided_slice %108 {offsets = [0, 32], sizes = [1, 32], strides = [1, 1]} : vector<1x96xf32> to vector<1x32xf32>
    %111 = vector.extract_strided_slice %108 {offsets = [0, 64], sizes = [1, 32], strides = [1, 1]} : vector<1x96xf32> to vector<1x32xf32>
    %112 = vector.extract_strided_slice %103 {offsets = [0, 96], sizes = [1, 32], strides = [1, 1]} : vector<1x128xf32> to vector<1x32xf32>
    %113 = arith.mulf %110, %94 : vector<1x32xf32>
    %114 = arith.mulf %109, %112 : vector<1x32xf32>
    %115 = arith.addf %113, %114 : vector<1x32xf32>
    %116 = math.tanh %115 : vector<1x32xf32>
    %117 = arith.mulf %111, %116 : vector<1x32xf32>
    %118 = arith.index_cast %c4_i32 : i32 to index
    %c0_39 = arith.constant 0 : index
    %119 = vector.load %arg10[%118, %c0_39] : memref<8x32xf32, #tpu.memory_space<vmem>>, vector<1x32xf32>
    tpu.vector_store %arg10[%118, %c0_39], %117 {strides = array<i32>} : memref<8x32xf32, #tpu.memory_space<vmem>>, vector<1x32xf32>,
    %c5_i32 = arith.constant 5 : i32
    %120 = arith.index_cast %c5_i32 : i32 to index
    %c0_40 = arith.constant 0 : index
    %121 = vector.load %arg11[%120, %c0_40] : memref<8x128xf32, #tpu.memory_space<vmem>>, vector<1x128xf32>
    %cst_41 = arith.constant dense<0.000000e+00> : vector<1x128xf32>
    %122 = tpu.matmul %117, %6, %cst_41 {dimension_numbers = #tpu.dot_dimension_numbers<[1], [0], [0], [1], [0, 0, 1, 1], [], []>} : vector<1x32xf32>, vector<32x128xf32>, vector<1x128xf32> -> vector<1x128xf32>
    %123 = arith.addf %121, %122 : vector<1x128xf32>
    %124 = math.tanh %123 : vector<1x128xf32>
    %125 = vector.extract_strided_slice %124 {offsets = [0, 0], sizes = [1, 96], strides = [1, 1]} : vector<1x128xf32> to vector<1x96xf32>
    %cst_42 = arith.constant 1.000000e+00 : f32
    %126 = vector.broadcast %cst_42 : f32 to vector<1x96xf32>
    %127 = arith.addf %125, %126 : vector<1x96xf32>
    %cst_43 = arith.constant 5.000000e-01 : f32
    %128 = vector.broadcast %cst_43 : f32 to vector<1x96xf32>
    %129 = arith.mulf %128, %127 : vector<1x96xf32>
    %130 = vector.extract_strided_slice %129 {offsets = [0, 0], sizes = [1, 32], strides = [1, 1]} : vector<1x96xf32> to vector<1x32xf32>
    %131 = vector.extract_strided_slice %129 {offsets = [0, 32], sizes = [1, 32], strides = [1, 1]} : vector<1x96xf32> to vector<1x32xf32>
    %132 = vector.extract_strided_slice %129 {offsets = [0, 64], sizes = [1, 32], strides = [1, 1]} : vector<1x96xf32> to vector<1x32xf32>
    %133 = vector.extract_strided_slice %124 {offsets = [0, 96], sizes = [1, 32], strides = [1, 1]} : vector<1x128xf32> to vector<1x32xf32>
    %134 = arith.mulf %131, %115 : vector<1x32xf32>
    %135 = arith.mulf %130, %133 : vector<1x32xf32>
    %136 = arith.addf %134, %135 : vector<1x32xf32>
    %137 = math.tanh %136 : vector<1x32xf32>
    %138 = arith.mulf %132, %137 : vector<1x32xf32>
    %139 = arith.index_cast %c5_i32 : i32 to index
    %c0_44 = arith.constant 0 : index
    %140 = vector.load %arg10[%139, %c0_44] : memref<8x32xf32, #tpu.memory_space<vmem>>, vector<1x32xf32>
    tpu.vector_store %arg10[%139, %c0_44], %138 {strides = array<i32>} : memref<8x32xf32, #tpu.memory_space<vmem>>, vector<1x32xf32>,
    %c6_i32 = arith.constant 6 : i32
    %141 = arith.index_cast %c6_i32 : i32 to index
    %c0_45 = arith.constant 0 : index
    %142 = vector.load %arg11[%141, %c0_45] : memref<8x128xf32, #tpu.memory_space<vmem>>, vector<1x128xf32>
    %cst_46 = arith.constant dense<0.000000e+00> : vector<1x128xf32>
    %143 = tpu.matmul %138, %6, %cst_46 {dimension_numbers = #tpu.dot_dimension_numbers<[1], [0], [0], [1], [0, 0, 1, 1], [], []>} : vector<1x32xf32>, vector<32x128xf32>, vector<1x128xf32> -> vector<1x128xf32>
    %144 = arith.addf %142, %143 : vector<1x128xf32>
    %145 = math.tanh %144 : vector<1x128xf32>
    %146 = vector.extract_strided_slice %145 {offsets = [0, 0], sizes = [1, 96], strides = [1, 1]} : vector<1x128xf32> to vector<1x96xf32>
    %cst_47 = arith.constant 1.000000e+00 : f32
    %147 = vector.broadcast %cst_47 : f32 to vector<1x96xf32>
    %148 = arith.addf %146, %147 : vector<1x96xf32>
    %cst_48 = arith.constant 5.000000e-01 : f32
    %149 = vector.broadcast %cst_48 : f32 to vector<1x96xf32>
    %150 = arith.mulf %149, %148 : vector<1x96xf32>
    %151 = vector.extract_strided_slice %150 {offsets = [0, 0], sizes = [1, 32], strides = [1, 1]} : vector<1x96xf32> to vector<1x32xf32>
    %152 = vector.extract_strided_slice %150 {offsets = [0, 32], sizes = [1, 32], strides = [1, 1]} : vector<1x96xf32> to vector<1x32xf32>
    %153 = vector.extract_strided_slice %150 {offsets = [0, 64], sizes = [1, 32], strides = [1, 1]} : vector<1x96xf32> to vector<1x32xf32>
    %154 = vector.extract_strided_slice %145 {offsets = [0, 96], sizes = [1, 32], strides = [1, 1]} : vector<1x128xf32> to vector<1x32xf32>
    %155 = arith.mulf %152, %136 : vector<1x32xf32>
    %156 = arith.mulf %151, %154 : vector<1x32xf32>
    %157 = arith.addf %155, %156 : vector<1x32xf32>
    %158 = math.tanh %157 : vector<1x32xf32>
    %159 = arith.mulf %153, %158 : vector<1x32xf32>
    %160 = arith.index_cast %c6_i32 : i32 to index
    %c0_49 = arith.constant 0 : index
    %161 = vector.load %arg10[%160, %c0_49] : memref<8x32xf32, #tpu.memory_space<vmem>>, vector<1x32xf32>
    tpu.vector_store %arg10[%160, %c0_49], %159 {strides = array<i32>} : memref<8x32xf32, #tpu.memory_space<vmem>>, vector<1x32xf32>,
    %c7_i32 = arith.constant 7 : i32
    %162 = arith.index_cast %c7_i32 : i32 to index
    %c0_50 = arith.constant 0 : index
    %163 = vector.load %arg11[%162, %c0_50] : memref<8x128xf32, #tpu.memory_space<vmem>>, vector<1x128xf32>
    %cst_51 = arith.constant dense<0.000000e+00> : vector<1x128xf32>
    %164 = tpu.matmul %159, %6, %cst_51 {dimension_numbers = #tpu.dot_dimension_numbers<[1], [0], [0], [1], [0, 0, 1, 1], [], []>} : vector<1x32xf32>, vector<32x128xf32>, vector<1x128xf32> -> vector<1x128xf32>
    %165 = arith.addf %163, %164 : vector<1x128xf32>
    %166 = math.tanh %165 : vector<1x128xf32>
    %167 = vector.extract_strided_slice %166 {offsets = [0, 0], sizes = [1, 96], strides = [1, 1]} : vector<1x128xf32> to vector<1x96xf32>
    %cst_52 = arith.constant 1.000000e+00 : f32
    %168 = vector.broadcast %cst_52 : f32 to vector<1x96xf32>
    %169 = arith.addf %167, %168 : vector<1x96xf32>
    %cst_53 = arith.constant 5.000000e-01 : f32
    %170 = vector.broadcast %cst_53 : f32 to vector<1x96xf32>
    %171 = arith.mulf %170, %169 : vector<1x96xf32>
    %172 = vector.extract_strided_slice %171 {offsets = [0, 0], sizes = [1, 32], strides = [1, 1]} : vector<1x96xf32> to vector<1x32xf32>
    %173 = vector.extract_strided_slice %171 {offsets = [0, 32], sizes = [1, 32], strides = [1, 1]} : vector<1x96xf32> to vector<1x32xf32>
    %174 = vector.extract_strided_slice %171 {offsets = [0, 64], sizes = [1, 32], strides = [1, 1]} : vector<1x96xf32> to vector<1x32xf32>
    %175 = vector.extract_strided_slice %166 {offsets = [0, 96], sizes = [1, 32], strides = [1, 1]} : vector<1x128xf32> to vector<1x32xf32>
    %176 = arith.mulf %173, %157 : vector<1x32xf32>
    %177 = arith.mulf %172, %175 : vector<1x32xf32>
    %178 = arith.addf %176, %177 : vector<1x32xf32>
    %179 = math.tanh %178 : vector<1x32xf32>
    %180 = arith.mulf %174, %179 : vector<1x32xf32>
    %181 = arith.index_cast %c7_i32 : i32 to index
    %c0_54 = arith.constant 0 : index
    %182 = vector.load %arg10[%181, %c0_54] : memref<8x32xf32, #tpu.memory_space<vmem>>, vector<1x32xf32>
    tpu.vector_store %arg10[%181, %c0_54], %180 {strides = array<i32>} : memref<8x32xf32, #tpu.memory_space<vmem>>, vector<1x32xf32>,
    %c8_i32 = arith.constant 8 : i32
    %c1_i32_55 = arith.constant 1 : i32
    %183 = arith.cmpi eq, %arg0, %c1_i32_55 : i32
    %184 = arith.extui %183 : i1 to i32
    %c0_i32_56 = arith.constant 0 : i32
    %185 = arith.cmpi ne, %184, %c0_i32_56 : i32
    scf.if %185 {
      %c0_57 = arith.constant 0 : index
      %c0_58 = arith.constant 0 : index
      %186 = vector.load %arg10[%c0_57, %c0_58] : memref<8x32xf32, #tpu.memory_space<vmem>>, vector<8x32xf32>
      %c0_59 = arith.constant 0 : index
      %c0_60 = arith.constant 0 : index
      %187 = vector.load %arg9[%c0_59, %c0_60] : memref<8x32xf32, #tpu.memory_space<vmem>>, vector<8x32xf32>
      tpu.vector_store %arg9[%c0_59, %c0_60], %186 {strides = array<i32>} : memref<8x32xf32, #tpu.memory_space<vmem>>, vector<8x32xf32>,
      %c0_61 = arith.constant 0 : index
      %c0_62 = arith.constant 0 : index
      %188 = vector.load %arg6[%c0_61, %c0_62] : memref<32x128xf32, #tpu.memory_space<vmem>>, vector<32x128xf32>
      %cst_63 = arith.constant dense<0.000000e+00> : vector<8x128xf32>
      %189 = tpu.matmul %186, %188, %cst_63 {dimension_numbers = #tpu.dot_dimension_numbers<[1], [0], [0], [1], [0, 0, 1, 1], [], []>} : vector<8x32xf32>, vector<32x128xf32>, vector<8x128xf32> -> vector<8x128xf32>
      %c0_64 = arith.constant 0 : index
      %c0_65 = arith.constant 0 : index
      %190 = vector.load %arg7[%c0_64, %c0_65] : memref<1x128xf32, #tpu.memory_space<vmem>>, vector<1x128xf32>
      %191 = vector.broadcast %190 : vector<1x128xf32> to vector<8x128xf32>
      %192 = arith.addf %189, %191 : vector<8x128xf32>
      %c0_66 = arith.constant 0 : index
      %c0_67 = arith.constant 0 : index
      %193 = vector.load %arg8[%c0_66, %c0_67] : memref<8x128xf32, #tpu.memory_space<vmem>>, vector<8x128xf32>
      tpu.vector_store %arg8[%c0_66, %c0_67], %192 {strides = array<i32>} : memref<8x128xf32, #tpu.memory_space<vmem>>, vector<8x128xf32>,
    } else {
    }
    return
  }
  func.func @transform_0(%arg0: i32, %arg1: memref<8xi32, #tpu.memory_space<smem>>) -> (i32, i32) {
    %c0_i32 = arith.constant 0 : i32
    %c0_i32_0 = arith.constant 0 : i32
    %c0_i32_1 = arith.constant 0 : i32
    return %c0_i32, %c0_i32_0 : i32, i32
  }
  func.func @transform_1(%arg0: i32, %arg1: memref<8xi32, #tpu.memory_space<smem>>) -> (i32, i32, i32) {
    %c0_i32 = arith.constant 0 : i32
    %c0_i32_0 = arith.constant 0 : i32
    %c0_i32_1 = arith.constant 0 : i32
    return %arg0, %c0_i32, %c0_i32_0 : i32, i32, i32
  }
  func.func @transform_2(%arg0: i32, %arg1: memref<8xi32, #tpu.memory_space<smem>>) -> (i32, i32, i32) {
    %c0_i32 = arith.constant 0 : i32
    %c0_i32_0 = arith.constant 0 : i32
    %c0_i32_1 = arith.constant 0 : i32
    return %arg0, %c0_i32, %c0_i32_0 : i32, i32, i32
  }
  func.func @transform_3(%arg0: i32, %arg1: memref<8xi32, #tpu.memory_space<smem>>) -> (i32, i32, i32) {
    %c0_i32 = arith.constant 0 : i32
    %c0_i32_0 = arith.constant 0 : i32
    %c0_i32_1 = arith.constant 0 : i32
    return %arg0, %c0_i32, %c0_i32_0 : i32, i32, i32
  }
  func.func @transform_4(%arg0: i32, %arg1: memref<8xi32, #tpu.memory_space<smem>>) -> (i32, i32) {
    %c0_i32 = arith.constant 0 : i32
    %c0_i32_0 = arith.constant 0 : i32
    %c0_i32_1 = arith.constant 0 : i32
    return %c0_i32, %c0_i32_0 : i32, i32
  }
  func.func @transform_5(%arg0: i32, %arg1: memref<8xi32, #tpu.memory_space<smem>>) -> (i32, i32) {
    %c0_i32 = arith.constant 0 : i32
    %c0_i32_0 = arith.constant 0 : i32
    %c0_i32_1 = arith.constant 0 : i32
    return %c0_i32, %c0_i32_0 : i32, i32
  }
  func.func @transform_6(%arg0: i32, %arg1: memref<8xi32, #tpu.memory_space<smem>>) -> (i32, i32) {
    %c0_i32 = arith.constant 0 : i32
    %c0_i32_0 = arith.constant 0 : i32
    %c0_i32_1 = arith.constant 0 : i32
    return %c0_i32, %c0_i32_0 : i32, i32
  }
  func.func @transform_7(%arg0: i32, %arg1: memref<8xi32, #tpu.memory_space<smem>>) -> (i32, i32) {
    %c0_i32 = arith.constant 0 : i32
    %c0_i32_0 = arith.constant 0 : i32
    %c0_i32_1 = arith.constant 0 : i32
    return %c0_i32, %c0_i32_0 : i32, i32
  }
}

</mosaic_0001>

<llo_original>
// kernel: tpu_custom_call.1
$region0: #{tpu_custom_call.1}
  #allocation0 [shape = 'u32[]', space=smem, size = 0x4, offset = 0x4, fixed_abs, tag = 'smem constant byte address 0x4 - core index']
  #allocation1 [shape = 'u32[72,128]{1,0:T(1,128)}', space=vmem, size = 0x9000, scoped, tag = 'internal scratch']
  #allocation2 [shape = 'f32[8,32]{1,0:T(8,128)}', space=vmem, size = 0x1000, scoped, tag = 'scratch operand']
  #allocation3 [shape = 'f32[8,128]{1,0:T(8,128)}', space=vmem, size = 0x1000, scoped, tag = 'scratch operand']
  #allocation4 [shape = 's32[1]{0}', space=sflag, size = 0x4, scoped, tag = 'scoped memory for tpu_custom_call.1']
  #allocation5 [shape = 'u8[512]{0}', space=smem, size = 0x200, scoped, tag = 'prefetched SMEM operand 0']
  %s0 = inlined_call_operand.vmem [shape: s32[8], index: 0, kind: input, shape index: {}]
  %s1 = inlined_call_operand.vmem [shape: f32[64,32], index: 1, kind: input, shape index: {}]
  %s2 = inlined_call_operand.vmem [shape: f32[2,32,128], index: 2, kind: input, shape index: {}]
  %s3 = inlined_call_operand.hbm [shape: f32[2,32,128], index: 3, kind: input, shape index: {}]
  %s4 = inlined_call_operand.vmem [shape: f32[2,1,128], index: 4, kind: input, shape index: {}]
  %s5 = inlined_call_operand.vmem [shape: f32[32,128], index: 5, kind: input, shape index: {}]
  %s6 = inlined_call_operand.vmem [shape: f32[1,128], index: 6, kind: input, shape index: {}]
  %s7 = inlined_call_operand.hbm [shape: f32[8,128], index: 7, kind: output, shape index: {0}]
  %s8 = inlined_call_operand.hbm [shape: f32[8,32], index: 8, kind: output, shape index: {1}]
  %9 = xla_tuple %s7, %s8
  %s10 = sld [smem:[#allocation0]]
  $region77: #{tpu_custom_call.1} parent=0
    _
  %s12 = ssub.s32 1, %s10
  %s13 = scalar_select 0, %s12, %s10
  %s15 = sshll.u32 %s0, 4
  %s16 = int_to_ptr.vmem [resolvable:$true] %s15
  %18 = dma.vmem_to_smem %s16, 16, [#allocation5], [#allocation4]
  %20 = dma.done [#allocation4], 16
  %21 = sfence
  $region1: #{tpu_custom_call.1} parent=0
    #allocation6 [shape = 'u8[32768]{0}', space=vmem, size = 0x8000, scoped, tag = 'input window, operand 3']
    #allocation7 [shape = 's32[2]{0}', space=sflag, size = 0x8, scoped, tag = 'scoped memory for tpu_custom_call.1']
    #allocation8 [shape = 's32[2]{0}', space=sflag, size = 0x8, scoped, tag = 'scoped memory for tpu_custom_call.1']
    #allocation9 [shape = 'u8[4096]{0}', space=vmem, size = 0x1000, scoped, tag = 'output window, operand 0, single buffered']
    #allocation10 [shape = 'u8[4096]{0}', space=vmem, size = 0x1000, scoped, tag = 'output window, operand 1, single buffered']
    #allocation11 [shape = 's32[1]{0}', space=sflag, size = 0x4, scoped, tag = 'scoped memory for tpu_custom_call.1']
    %22 = vsyncpa [#allocation7], 0
    %s23 = scalar_lea.sflag [#allocation7], 1
    %24 = vsyncpa %s23, 0
    %25 = vsyncpa [#allocation8], 0
    %26 = vsyncpa [#allocation11], 0
    loop: start=0, step=1, limit=4
    $region2: #{tpu_custom_call.1} parent=1 // loop_pre_header
      _
    $region3: #{tpu_custom_call.1} parent=1 // loop_header
      %s28 = sphi 0, %s32
      %p29 = scmp.ge.s32.totalorder %s28, 4
      %s36 = sphi 0, %s36
      %s38 = sphi 0, %s36
      %s39 = sphi 0, %s38
      %s53 = sphi 0, %s39
      %s59 = sphi 0, %s61
      %s62 = sphi 0, %s59
      %s63 = sphi 0, %s62
      %s79 = sphi 0, %s63
      %s85 = sphi 0, %s87
      %s88 = sphi 0, %s85
      %s89 = sphi 0, %s88
      %s105 = sphi 0, %s89
      %s111 = sphi 0, %s113
      %s114 = sphi 0, %s111
      %s115 = sphi 0, %s114
      %s131 = sphi 0, %s115
      %s135 = sphi 0, %s135
      %s137 = sphi 0, %s135
      %s138 = sphi 0, %s137
      %s152 = sphi 0, %s138
      %s156 = sphi 0, %s156
      %s158 = sphi 0, %s156
      %s159 = sphi 0, %s158
      %s173 = sphi 0, %s159
      %s177 = sphi 0, %s177
      %s179 = sphi 0, %s177
      %s180 = sphi 0, %s179
      %s194 = sphi 0, %s180
      %s198 = sphi 0, %s198
      %s200 = sphi 0, %s198
      %s201 = sphi 0, %s200
      %s215 = sphi 0, %s201
    $region4: #{tpu_custom_call.1} parent=1 // loop_header_branch
      %31 = sbr.rel (%p29) target = $region8
    $region5: #{tpu_custom_call.1} parent=1 // loop_body
      %s33 = ssub.s32 %s28, 1
      %s34 = ssub.s32 %s28, 2
      %s35 = sadd.s32 %s28, 1
      %s37 = sadd.s32 %s36, 1
      %p40 = scmp.eq.s32.totalorder %s28, 1
      %p41 = scmp.ne.s32.totalorder %s36, %s38
      %p42 = scmp.eq.s32.totalorder %s28, 0
      %p43 = por %p41, %p42
      %p44 = scmp.ne.s32.totalorder %s36, %s38
      %p45 = scmp.eq.s32.totalorder %s33, 1
      %p46 = por %p44, %p45
      %p47 = scmp.ne.s32.totalorder %s38, %s39
      %p48 = scmp.eq.s32.totalorder %s33, 0
      %p49 = por %p47, %p48
      %p50 = scmp.ne.s32.totalorder %s38, %s39
      %p51 = scmp.eq.s32.totalorder %s34, 1
      %p52 = por %p50, %p51
      %p54 = scmp.ne.s32.totalorder %s39, %s53
      %p55 = scmp.eq.s32.totalorder %s34, 0
      %p56 = por %p54, %p55
      %s57 = ssub.s32 %s28, %s35
      %p58 = scmp.eq.s32.totalorder %s57, 0
      %s60 = sadd.s32 %s59, 1
      %s61 = scalar_select %p58, %s59, %s60
      %p64 = pneg %p58
      %p65 = scmp.eq.s32.totalorder %s28, 1
      %p66 = por %p64, %p65
      %p67 = scmp.ne.s32.totalorder %s59, %s62
      %p68 = scmp.eq.s32.totalorder %s28, 0
      %p69 = por %p67, %p68
      %p70 = scmp.ne.s32.totalorder %s59, %s62
      %p71 = scmp.eq.s32.totalorder %s33, 1
      %p72 = por %p70, %p71
      %p73 = scmp.ne.s32.totalorder %s62, %s63
      %p74 = scmp.eq.s32.totalorder %s33, 0
      %p75 = por %p73, %p74
      %p76 = scmp.ne.s32.totalorder %s62, %s63
      %p77 = scmp.eq.s32.totalorder %s34, 1
      %p78 = por %p76, %p77
      %p80 = scmp.ne.s32.totalorder %s63, %s79
      %p81 = scmp.eq.s32.totalorder %s34, 0
      %p82 = por %p80, %p81
      %s83 = ssub.s32 %s28, %s35
      %p84 = scmp.eq.s32.totalorder %s83, 0
      %s86 = sadd.s32 %s85, 1
      %s87 = scalar_select %p84, %s85, %s86
      %p90 = pneg %p84
      %p91 = scmp.eq.s32.totalorder %s28, 1
      %p92 = por %p90, %p91
      %p93 = scmp.ne.s32.totalorder %s85, %s88
      %p94 = scmp.eq.s32.totalorder %s28, 0
      %p95 = por %p93, %p94
      %p96 = scmp.ne.s32.totalorder %s85, %s88
      %p97 = scmp.eq.s32.totalorder %s33, 1
      %p98 = por %p96, %p97
      %p99 = scmp.ne.s32.totalorder %s88, %s89
      %p100 = scmp.eq.s32.totalorder %s33, 0
      %p101 = por %p99, %p100
      %p102 = scmp.ne.s32.totalorder %s88, %s89
      %p103 = scmp.eq.s32.totalorder %s34, 1
      %p104 = por %p102, %p103
      %p106 = scmp.ne.s32.totalorder %s89, %s105
      %p107 = scmp.eq.s32.totalorder %s34, 0
      %p108 = por %p106, %p107
      %s109 = ssub.s32 %s28, %s35
      %p110 = scmp.eq.s32.totalorder %s109, 0
      %s112 = sadd.s32 %s111, 1
      %s113 = scalar_select %p110, %s111, %s112
      %p116 = pneg %p110
      %p117 = scmp.eq.s32.totalorder %s28, 1
      %p118 = por %p116, %p117
      %p119 = scmp.ne.s32.totalorder %s111, %s114
      %p120 = scmp.eq.s32.totalorder %s28, 0
      %p121 = por %p119, %p120
      %p122 = scmp.ne.s32.totalorder %s111, %s114
      %p123 = scmp.eq.s32.totalorder %s33, 1
      %p124 = por %p122, %p123
      %p125 = scmp.ne.s32.totalorder %s114, %s115
      %p126 = scmp.eq.s32.totalorder %s33, 0
      %p127 = por %p125, %p126
      %p128 = scmp.ne.s32.totalorder %s114, %s115
      %p129 = scmp.eq.s32.totalorder %s34, 1
      %p130 = por %p128, %p129
      %p132 = scmp.ne.s32.totalorder %s115, %s131
      %p133 = scmp.eq.s32.totalorder %s34, 0
      %p134 = por %p132, %p133
      %s136 = sadd.s32 %s135, 1
      %p139 = scmp.eq.s32.totalorder %s28, 1
      %p140 = scmp.ne.s32.totalorder %s135, %s137
      %p141 = scmp.eq.s32.totalorder %s28, 0
      %p142 = por %p140, %p141
      %p143 = scmp.ne.s32.totalorder %s135, %s137
      %p144 = scmp.eq.s32.totalorder %s33, 1
      %p145 = por %p143, %p144
      %p146 = scmp.ne.s32.totalorder %s137, %s138
      %p147 = scmp.eq.s32.totalorder %s33, 0
      %p148 = por %p146, %p147
      %p149 = scmp.ne.s32.totalorder %s137, %s138
      %p150 = scmp.eq.s32.totalorder %s34, 1
      %p151 = por %p149, %p150
      %p153 = scmp.ne.s32.totalorder %s138, %s152
      %p154 = scmp.eq.s32.totalorder %s34, 0
      %p155 = por %p153, %p154
      %s157 = sadd.s32 %s156, 1
      %p160 = scmp.eq.s32.totalorder %s28, 1
      %p161 = scmp.ne.s32.totalorder %s156, %s158
      %p162 = scmp.eq.s32.totalorder %s28, 0
      %p163 = por %p161, %p162
      %p164 = scmp.ne.s32.totalorder %s156, %s158
      %p165 = scmp.eq.s32.totalorder %s33, 1
      %p166 = por %p164, %p165
      %p167 = scmp.ne.s32.totalorder %s158, %s159
      %p168 = scmp.eq.s32.totalorder %s33, 0
      %p169 = por %p167, %p168
      %p170 = scmp.ne.s32.totalorder %s158, %s159
      %p171 = scmp.eq.s32.totalorder %s34, 1
      %p172 = por %p170, %p171
      %p174 = scmp.ne.s32.totalorder %s159, %s173
      %p175 = scmp.eq.s32.totalorder %s34, 0
      %p176 = por %p174, %p175
      %s178 = sadd.s32 %s177, 1
      %p181 = scmp.eq.s32.totalorder %s28, 1
      %p182 = scmp.ne.s32.totalorder %s177, %s179
      %p183 = scmp.eq.s32.totalorder %s28, 0
      %p184 = por %p182, %p183
      %p185 = scmp.ne.s32.totalorder %s177, %s179
      %p186 = scmp.eq.s32.totalorder %s33, 1
      %p187 = por %p185, %p186
      %p188 = scmp.ne.s32.totalorder %s179, %s180
      %p189 = scmp.eq.s32.totalorder %s33, 0
      %p190 = por %p188, %p189
      %p191 = scmp.ne.s32.totalorder %s179, %s180
      %p192 = scmp.eq.s32.totalorder %s34, 1
      %p193 = por %p191, %p192
      %p195 = scmp.ne.s32.totalorder %s180, %s194
      %p196 = scmp.eq.s32.totalorder %s34, 0
      %p197 = por %p195, %p196
      %s199 = sadd.s32 %s198, 1
      %p202 = scmp.eq.s32.totalorder %s28, 1
      %p203 = scmp.ne.s32.totalorder %s198, %s200
      %p204 = scmp.eq.s32.totalorder %s28, 0
      %p205 = por %p203, %p204
      %p206 = scmp.ne.s32.totalorder %s198, %s200
      %p207 = scmp.eq.s32.totalorder %s33, 1
      %p208 = por %p206, %p207
      %p209 = scmp.ne.s32.totalorder %s200, %s201
      %p210 = scmp.eq.s32.totalorder %s33, 0
      %p211 = por %p209, %p210
      %p212 = scmp.ne.s32.totalorder %s200, %s201
      %p213 = scmp.eq.s32.totalorder %s34, 1
      %p214 = por %p212, %p213
      %p216 = scmp.ne.s32.totalorder %s201, %s215
      %p217 = scmp.eq.s32.totalorder %s34, 0
      %p218 = por %p216, %p217
      %p219 = scmp.le.s32.totalorder 1, %s28
      %p220 = scmp.lt.s32.totalorder %s28, 3
      %p221 = pnand %p219, %p220
      %p222 = pneg %p221
      // Predicated region
      $region9: #{tpu_custom_call.1} parent=5 // pred_check
        _
      $region10: #{tpu_custom_call.1} parent=5 // pred_check_branch
        %224 = sbr.rel (%p221) target = $region12
      $region11: #{tpu_custom_call.1} parent=5 // pred_region
        %s225 = ssub.s32 %s28, 1
        // Predicated region
        $region13: #{tpu_custom_call.1} parent=11 // pred_check
          %p226 = pneg %p49
        $region14: #{tpu_custom_call.1} parent=11 // pred_check_branch
          %228 = sbr.rel (%p226) target = $region16
        $region15: #{tpu_custom_call.1} parent=11 // pred_region
          _
        $region16: #{tpu_custom_call.1} parent=11 // pred_fallthru
          _
        // Predicated region
        $region17: #{tpu_custom_call.1} parent=11 // pred_check
          %p229 = pneg %p148
        $region18: #{tpu_custom_call.1} parent=11 // pred_check_branch
          %231 = sbr.rel (%p229) target = $region20
        $region19: #{tpu_custom_call.1} parent=11 // pred_region
          _
        $region20: #{tpu_custom_call.1} parent=11 // pred_fallthru
          _
        // Predicated region
        $region21: #{tpu_custom_call.1} parent=11 // pred_check
          %p232 = pneg %p169
        $region22: #{tpu_custom_call.1} parent=11 // pred_check_branch
          %234 = sbr.rel (%p232) target = $region24
        $region23: #{tpu_custom_call.1} parent=11 // pred_region
          _
        $region24: #{tpu_custom_call.1} parent=11 // pred_fallthru
          _
      $region12: #{tpu_custom_call.1} parent=5 // pred_fallthru
        _
      %p235 = scmp.lt.s32.totalorder %s28, 2
      // Predicated region
      $region25: #{tpu_custom_call.1} parent=5 // pred_check
        %p236 = pneg %p235
      $region26: #{tpu_custom_call.1} parent=5 // pred_check_branch
        %238 = sbr.rel (%p236) target = $region28
      $region27: #{tpu_custom_call.1} parent=5 // pred_region
        // Predicated region
        $region29: #{tpu_custom_call.1} parent=27 // pred_check
          %p239 = pneg %p69
        $region30: #{tpu_custom_call.1} parent=27 // pred_check_branch
          %241 = sbr.rel (%p239) target = $region32
        $region31: #{tpu_custom_call.1} parent=27 // pred_region
          %p242 = scmp.lt.s32.totalorder %s28, 1
          %s243 = scalar_select %p242, %s28, 1
          %s244 = smul.addr %s243, 4
          %s245 = smul.addr %s244, 8
          %s246 = scalar_lea.vmem %s2, %s245
        $region32: #{tpu_custom_call.1} parent=27 // pred_fallthru
          _
        // Predicated region
        $region33: #{tpu_custom_call.1} parent=27 // pred_check
          %p247 = pneg %p95
        $region34: #{tpu_custom_call.1} parent=27 // pred_check_branch
          %249 = sbr.rel (%p247) target = $region36
        $region35: #{tpu_custom_call.1} parent=27 // pred_region
          %s250 = sand.u32 %s85, 1
          %s251 = scalar_lea.sflag [#allocation7], %s250
          %s252 = sand.u32 %s85, 1
          %s253 = smul.addr %s252, 32
          %s254 = scalar_lea.vmem [#allocation6], %s253
          %256 = vsyncadd %s251, 0
          %s257 = smul.addr %s28, 4
          %s258 = smul.addr %s257, 8
          %s259 = scalar_lea.hbm %s3, %s258
          %s260 = sshll.u32 %s259, 4
          %s261 = int_to_ptr.hbm [resolvable:$true] %s260
          %s262 = sshll.u32 %s254, 4
          %s263 = int_to_ptr.vmem [resolvable:$true] %s262
          %268 = dma.hbm_to_vmem [thread:$0]  %s261, 512, %s263, %s251, 128, 128, 8
        $region36: #{tpu_custom_call.1} parent=27 // pred_fallthru
          _
        // Predicated region
        $region37: #{tpu_custom_call.1} parent=27 // pred_check
          %p269 = pneg %p121
        $region38: #{tpu_custom_call.1} parent=27 // pred_check_branch
          %271 = sbr.rel (%p269) target = $region40
        $region39: #{tpu_custom_call.1} parent=27 // pred_region
          %p272 = scmp.lt.s32.totalorder %s28, 1
          %s273 = scalar_select %p272, %s28, 1
          %s274 = scalar_lea.vmem %s4, %s273
        $region40: #{tpu_custom_call.1} parent=27 // pred_fallthru
          _
      $region28: #{tpu_custom_call.1} parent=5 // pred_fallthru
        _
      %p275 = scmp.le.s32.totalorder 1, %s28
      %p276 = scmp.lt.s32.totalorder %s28, 3
      %p277 = pnand %p275, %p276
      %p278 = pneg %p277
      // Predicated region
      $region41: #{tpu_custom_call.1} parent=5 // pred_check
        _
      $region42: #{tpu_custom_call.1} parent=5 // pred_check_branch
        %280 = sbr.rel (%p277) target = $region44
      $region43: #{tpu_custom_call.1} parent=5 // pred_region
        %s281 = ssub.s32 %s28, 1
        %s282 = sand.u32 %s88, 1
        %s283 = scalar_lea.sflag [#allocation7], %s282
        %s284 = sand.u32 %s88, 1
        %s285 = smul.addr %s284, 32
        %s286 = scalar_lea.vmem [#allocation6], %s285
        // Predicated region
        $region45: #{tpu_custom_call.1} parent=43 // pred_check
          %p287 = pneg %p101
        $region46: #{tpu_custom_call.1} parent=43 // pred_check_branch
          %289 = sbr.rel (%p287) target = $region48
        $region47: #{tpu_custom_call.1} parent=43 // pred_region
          %291 = dma.done %s283, 512
        $region48: #{tpu_custom_call.1} parent=43 // pred_fallthru
          _
        %p292 = pneg %p49
        %p293 = pneg %p46
        %p294 = scmp.lt.s32.totalorder %s33, 1
        %s295 = scalar_select %p294, %s33, 1
        %s296 = smul.addr %s295, 4
        %s297 = smul.addr %s296, 8
        %s298 = scalar_lea.vmem %s2, %s297
        %p299 = pneg %p75
        %p300 = pneg %p72
        %s301 = sand.u32 %s88, 1
        %s302 = scalar_lea.sflag [#allocation7], %s301
        %s303 = sand.u32 %s88, 1
        %s304 = smul.addr %s303, 32
        %s305 = scalar_lea.vmem [#allocation6], %s304
        %p306 = pneg %p101
        %p307 = pneg %p98
        %p308 = scmp.lt.s32.totalorder %s33, 1
        %s309 = scalar_select %p308, %s33, 1
        %s310 = scalar_lea.vmem %s4, %s309
        %p311 = pneg %p127
        %p312 = pneg %p124
        %p313 = pneg %p148
        %p314 = pneg %p145
        %p315 = pneg %p169
        %p316 = pneg %p166
        %p317 = pneg %p190
        %p318 = pneg %p187
        %p319 = pneg %p211
        %p320 = pneg %p208
        %p321 = scmp.lt.s32.totalorder %s33, 1
        %s322 = scalar_select %p321, %s33, 1
        %s323 = smul.addr %s322, 4
        %s324 = smul.addr %s323, 8
        %s325 = scalar_lea.vmem %s2, %s324
        %p326 = scmp.lt.s32.totalorder %s33, 1
        %s327 = scalar_select %p326, %s33, 1
        %s328 = scalar_lea.vmem %s4, %s327
        %p329 = scmp.eq.s32.totalorder %s33, 0
        // Predicated region
        $region49: #{tpu_custom_call.1} parent=43 // pred_check
          %p330 = pneg %p329
        $region50: #{tpu_custom_call.1} parent=43 // pred_check_branch
          %332 = sbr.rel (%p330) target = $region52
        $region51: #{tpu_custom_call.1} parent=43 // pred_region
          %s333 = sld [smem:[#allocation5]]
          %s334 = scalar_lea.vmem %s1, %s333
          %v335 = vld [vmem:[%s334] sm:$0x1]
          %vm336 = vcmask 253952
          %337 = vst.msk [vmem:[#allocation2] sm:$0x1] %vm336, %v335
          %s338 = sld [smem:[#allocation5 + $0x1]]
          %s339 = scalar_lea.vmem %s1, %s338
          %v340 = vld [vmem:[%s339] sm:$0x1]
          %341 = vst.msk [vmem:[#allocation2 + $0x1] sm:$0x1] %vm336, %v340
          %s342 = sld [smem:[#allocation5 + $0x2]]
          %s343 = scalar_lea.vmem %s1, %s342
          %v344 = vld [vmem:[%s343] sm:$0x1]
          %345 = vst.msk [vmem:[#allocation2 + $0x2] sm:$0x1] %vm336, %v344
          %s346 = sld [smem:[#allocation5 + $0x3]]
          %s347 = scalar_lea.vmem %s1, %s346
          %v348 = vld [vmem:[%s347] sm:$0x1]
          %349 = vst.msk [vmem:[#allocation2 + $0x3] sm:$0x1] %vm336, %v348
          %s350 = sld [smem:[#allocation5 + $0x4]]
          %s351 = scalar_lea.vmem %s1, %s350
          %v352 = vld [vmem:[%s351] sm:$0x1]
          %353 = vst.msk [vmem:[#allocation2 + $0x4] sm:$0x1] %vm336, %v352
          %s354 = sld [smem:[#allocation5 + $0x5]]
          %s355 = scalar_lea.vmem %s1, %s354
          %v356 = vld [vmem:[%s355] sm:$0x1]
          %357 = vst.msk [vmem:[#allocation2 + $0x5] sm:$0x1] %vm336, %v356
          %s358 = sld [smem:[#allocation5 + $0x6]]
          %s359 = scalar_lea.vmem %s1, %s358
          %v360 = vld [vmem:[%s359] sm:$0x1]
          %361 = vst.msk [vmem:[#allocation2 + $0x6] sm:$0x1] %vm336, %v360
          %s362 = sld [smem:[#allocation5 + $0x7]]
          %s363 = scalar_lea.vmem %s1, %s362
          %v364 = vld [vmem:[%s363] sm:$0x1]
          %365 = vst.msk [vmem:[#allocation2 + $0x7] sm:$0x1] %vm336, %v364
        $region52: #{tpu_custom_call.1} parent=43 // pred_fallthru
          _
        %v366 = vld [vmem:[%s325] sm:$0xff]
        %v367 = vld [vmem:[%s325 + $0x8] sm:$0xff]
        %v368 = vld [vmem:[%s325 + $0x10] sm:$0xff]
        %v369 = vld [vmem:[%s325 + $0x18] sm:$0xff]
        %v370 = vld [vmem:[%s286] sm:$0xff]
        %v371 = vld [vmem:[%s286 + $0x8] sm:$0xff]
        %v372 = vld [vmem:[%s286 + $0x10] sm:$0xff]
        %v373 = vld [vmem:[%s286 + $0x18] sm:$0xff]
        %v374 = vld [vmem:[%s328] sm:$0x1]
        %v375 = vld [vmem:[#allocation2] sm:$0xff]
        %v377 = vperm.slane %v374, 0
        %vm379 = vcmask 261120
        %v381 = vsel %vm379, %v375, 0
        %383 = vmatpush.msra.mxu0 0.0
        %384 = vmatpush.msra.mxu0 0.0
        %385 = vmatpush.msra.mxu0 0.0
        %386 = vmatpush.msra.mxu0 0.0
        %387 = vmatpush.msra.mxu0 0.0
        %388 = vmatpush.msra.mxu0 0.0
        %389 = vmatpush.msra.mxu0 0.0
        %390 = vmatpush.msra.mxu0 0.0
        %391 = vmatpush.msra.mxu0 0.0
        %392 = vmatpush.msra.mxu0 0.0
        %393 = vmatpush.msra.mxu0 0.0
        %394 = vmatpush.msra.mxu0 0.0
        %395 = vmatpush.msra.mxu0 %v369
        %396 = vmatpush.msra.mxu0 %v368
        %397 = vmatpush.msra.mxu0 %v367
        %398 = vmatpush.msra.mxu0 %v366
        %399 = vmatmul.f32.gmra.mxu0 %v381
        %v400 = vpop.f32.mrf.mxu0
        %v401 = vadd.f32 %v377, %v400
        %402 = vdwg.mxu0
        %403 = vst [vmem:[#allocation3] sm:$0xff] %v401
        %v404 = vld [vmem:[#allocation3] sm:$0x1]
        %v406 = vsel %vm379, 0.0, 0
        %408 = vmatpush.msra.mxu0 0.0
        %409 = vmatpush.msra.mxu0 0.0
        %410 = vmatpush.msra.mxu0 0.0
        %411 = vmatpush.msra.mxu0 0.0
        %412 = vmatpush.msra.mxu0 0.0
        %413 = vmatpush.msra.mxu0 0.0
        %414 = vmatpush.msra.mxu0 0.0
        %415 = vmatpush.msra.mxu0 0.0
        %416 = vmatpush.msra.mxu0 0.0
        %417 = vmatpush.msra.mxu0 0.0
        %418 = vmatpush.msra.mxu0 0.0
        %419 = vmatpush.msra.mxu0 0.0
        %420 = vmatpush.msra.mxu0 %v373
        %421 = vmatpush.msra.mxu0 %v372
        %422 = vmatpush.msra.mxu0 %v371
        %423 = vmatpush.msra.mxu0 %v370
        %424 = vmatmul.f32.gmra.mxu0 %v406
        %v425 = vpop.f32.mrf.mxu0
        %v426 = vadd.f32 0.0, %v425
        %427 = vdwg.mxu0
        %v428 = vadd.f32 %v404, %v426
        %v429 = vtanh.pop %v428
        %v430 = vadd.f32 %v429, 1.0
        %v431 = vmul.f32 %v430, 0.5
        %v432 = vmul.f32 %v431, 0.0
        %434 = vrot.lane.b32.xlu0 %v429, 32
        %v435 = vpop.permute.xlu0 %434
        %v437 = vmul.f32 %v431, %v435
        %439 = vrot.lane.b32.xlu0 %v437, 32
        %v440 = vpop.permute.xlu0 %439
        %v442 = vadd.f32 %v432, %v440
        %v443 = vtanh.pop %v442
        %445 = vrot.lane.b32.xlu0 %v443, 32
        %v446 = vpop.permute.xlu0 %445
        %v448 = vmul.f32 %v431, %v446
        %450 = vrot.lane.b32.xlu0 %v448, 64
        %v451 = vpop.permute.xlu0 %450
        %vm453 = vcmask 253952
        %454 = vst.msk [vmem:[#allocation2] sm:$0x1] %vm453, %v451
        %v455 = vld [vmem:[#allocation3 + $0x1] sm:$0x1]
        %v456 = vsel %vm379, %v451, 0
        %458 = vmatpush.msra.mxu0 0.0
        %459 = vmatpush.msra.mxu0 0.0
        %460 = vmatpush.msra.mxu0 0.0
        %461 = vmatpush.msra.mxu0 0.0
        %462 = vmatpush.msra.mxu0 0.0
        %463 = vmatpush.msra.mxu0 0.0
        %464 = vmatpush.msra.mxu0 0.0
        %465 = vmatpush.msra.mxu0 0.0
        %466 = vmatpush.msra.mxu0 0.0
        %467 = vmatpush.msra.mxu0 0.0
        %468 = vmatpush.msra.mxu0 0.0
        %469 = vmatpush.msra.mxu0 0.0
        %470 = vmatpush.msra.mxu0 %v373
        %471 = vmatpush.msra.mxu0 %v372
        %472 = vmatpush.msra.mxu0 %v371
        %473 = vmatpush.msra.mxu0 %v370
        %474 = vmatmul.f32.gmra.mxu0 %v456
        %v475 = vpop.f32.mrf.mxu0
        %v476 = vadd.f32 0.0, %v475
        %477 = vdwg.mxu0
        %v478 = vadd.f32 %v455, %v476
        %v479 = vtanh.pop %v478
        %v480 = vadd.f32 %v479, 1.0
        %v481 = vmul.f32 %v480, 0.5
        %v482 = vmul.f32 %v481, %v442
        %484 = vrot.lane.b32.xlu0 %v479, 32
        %v485 = vpop.permute.xlu0 %484
        %v487 = vmul.f32 %v481, %v485
        %489 = vrot.lane.b32.xlu0 %v487, 32
        %v490 = vpop.permute.xlu0 %489
        %v492 = vadd.f32 %v482, %v490
        %v493 = vtanh.pop %v492
        %495 = vrot.lane.b32.xlu0 %v493, 32
        %v496 = vpop.permute.xlu0 %495
        %v498 = vmul.f32 %v481, %v496
        %500 = vrot.lane.b32.xlu0 %v498, 64
        %v501 = vpop.permute.xlu0 %500
        %503 = vst.msk [vmem:[#allocation2 + $0x1] sm:$0x1] %vm453, %v501
        %v504 = vld [vmem:[#allocation3 + $0x2] sm:$0x1]
        %v505 = vsel %vm379, %v501, 0
        %507 = vmatpush.msra.mxu0 0.0
        %508 = vmatpush.msra.mxu0 0.0
        %509 = vmatpush.msra.mxu0 0.0
        %510 = vmatpush.msra.mxu0 0.0
        %511 = vmatpush.msra.mxu0 0.0
        %512 = vmatpush.msra.mxu0 0.0
        %513 = vmatpush.msra.mxu0 0.0
        %514 = vmatpush.msra.mxu0 0.0
        %515 = vmatpush.msra.mxu0 0.0
        %516 = vmatpush.msra.mxu0 0.0
        %517 = vmatpush.msra.mxu0 0.0
        %518 = vmatpush.msra.mxu0 0.0
        %519 = vmatpush.msra.mxu0 %v373
        %520 = vmatpush.msra.mxu0 %v372
        %521 = vmatpush.msra.mxu0 %v371
        %522 = vmatpush.msra.mxu0 %v370
        %523 = vmatmul.f32.gmra.mxu0 %v505
        %v524 = vpop.f32.mrf.mxu0
        %v525 = vadd.f32 0.0, %v524
        %526 = vdwg.mxu0
        %v527 = vadd.f32 %v504, %v525
        %v528 = vtanh.pop %v527
        %v529 = vadd.f32 %v528, 1.0
        %v530 = vmul.f32 %v529, 0.5
        %v531 = vmul.f32 %v530, %v492
        %533 = vrot.lane.b32.xlu0 %v528, 32
        %v534 = vpop.permute.xlu0 %533
        %v536 = vmul.f32 %v530, %v534
        %538 = vrot.lane.b32.xlu0 %v536, 32
        %v539 = vpop.permute.xlu0 %538
        %v541 = vadd.f32 %v531, %v539
        %v542 = vtanh.pop %v541
        %544 = vrot.lane.b32.xlu0 %v542, 32
        %v545 = vpop.permute.xlu0 %544
        %v547 = vmul.f32 %v530, %v545
        %549 = vrot.lane.b32.xlu0 %v547, 64
        %v550 = vpop.permute.xlu0 %549
        %552 = vst.msk [vmem:[#allocation2 + $0x2] sm:$0x1] %vm453, %v550
        %v553 = vld [vmem:[#allocation3 + $0x3] sm:$0x1]
        %v554 = vsel %vm379, %v550, 0
        %556 = vmatpush.msra.mxu0 0.0
        %557 = vmatpush.msra.mxu0 0.0
        %558 = vmatpush.msra.mxu0 0.0
        %559 = vmatpush.msra.mxu0 0.0
        %560 = vmatpush.msra.mxu0 0.0
        %561 = vmatpush.msra.mxu0 0.0
        %562 = vmatpush.msra.mxu0 0.0
        %563 = vmatpush.msra.mxu0 0.0
        %564 = vmatpush.msra.mxu0 0.0
        %565 = vmatpush.msra.mxu0 0.0
        %566 = vmatpush.msra.mxu0 0.0
        %567 = vmatpush.msra.mxu0 0.0
        %568 = vmatpush.msra.mxu0 %v373
        %569 = vmatpush.msra.mxu0 %v372
        %570 = vmatpush.msra.mxu0 %v371
        %571 = vmatpush.msra.mxu0 %v370
        %572 = vmatmul.f32.gmra.mxu0 %v554
        %v573 = vpop.f32.mrf.mxu0
        %v574 = vadd.f32 0.0, %v573
        %575 = vdwg.mxu0
        %v576 = vadd.f32 %v553, %v574
        %v577 = vtanh.pop %v576
        %v578 = vadd.f32 %v577, 1.0
        %v579 = vmul.f32 %v578, 0.5
        %v580 = vmul.f32 %v579, %v541
        %582 = vrot.lane.b32.xlu0 %v577, 32
        %v583 = vpop.permute.xlu0 %582
        %v585 = vmul.f32 %v579, %v583
        %587 = vrot.lane.b32.xlu0 %v585, 32
        %v588 = vpop.permute.xlu0 %587
        %v590 = vadd.f32 %v580, %v588
        %v591 = vtanh.pop %v590
        %593 = vrot.lane.b32.xlu0 %v591, 32
        %v594 = vpop.permute.xlu0 %593
        %v596 = vmul.f32 %v579, %v594
        %598 = vrot.lane.b32.xlu0 %v596, 64
        %v599 = vpop.permute.xlu0 %598
        %601 = vst.msk [vmem:[#allocation2 + $0x3] sm:$0x1] %vm453, %v599
        %v602 = vld [vmem:[#allocation3 + $0x4] sm:$0x1]
        %v603 = vsel %vm379, %v599, 0
        %605 = vmatpush.msra.mxu0 0.0
        %606 = vmatpush.msra.mxu0 0.0
        %607 = vmatpush.msra.mxu0 0.0
        %608 = vmatpush.msra.mxu0 0.0
        %609 = vmatpush.msra.mxu0 0.0
        %610 = vmatpush.msra.mxu0 0.0
        %611 = vmatpush.msra.mxu0 0.0
        %612 = vmatpush.msra.mxu0 0.0
        %613 = vmatpush.msra.mxu0 0.0
        %614 = vmatpush.msra.mxu0 0.0
        %615 = vmatpush.msra.mxu0 0.0
        %616 = vmatpush.msra.mxu0 0.0
        %617 = vmatpush.msra.mxu0 %v373
        %618 = vmatpush.msra.mxu0 %v372
        %619 = vmatpush.msra.mxu0 %v371
        %620 = vmatpush.msra.mxu0 %v370
        %621 = vmatmul.f32.gmra.mxu0 %v603
        %v622 = vpop.f32.mrf.mxu0
        %v623 = vadd.f32 0.0, %v622
        %624 = vdwg.mxu0
        %v625 = vadd.f32 %v602, %v623
        %v626 = vtanh.pop %v625
        %v627 = vadd.f32 %v626, 1.0
        %v628 = vmul.f32 %v627, 0.5
        %v629 = vmul.f32 %v628, %v590
        %631 = vrot.lane.b32.xlu0 %v626, 32
        %v632 = vpop.permute.xlu0 %631
        %v634 = vmul.f32 %v628, %v632
        %636 = vrot.lane.b32.xlu0 %v634, 32
        %v637 = vpop.permute.xlu0 %636
        %v639 = vadd.f32 %v629, %v637
        %v640 = vtanh.pop %v639
        %642 = vrot.lane.b32.xlu0 %v640, 32
        %v643 = vpop.permute.xlu0 %642
        %v645 = vmul.f32 %v628, %v643
        %647 = vrot.lane.b32.xlu0 %v645, 64
        %v648 = vpop.permute.xlu0 %647
        %650 = vst.msk [vmem:[#allocation2 + $0x4] sm:$0x1] %vm453, %v648
        %v651 = vld [vmem:[#allocation3 + $0x5] sm:$0x1]
        %v652 = vsel %vm379, %v648, 0
        %654 = vmatpush.msra.mxu0 0.0
        %655 = vmatpush.msra.mxu0 0.0
        %656 = vmatpush.msra.mxu0 0.0
        %657 = vmatpush.msra.mxu0 0.0
        %658 = vmatpush.msra.mxu0 0.0
        %659 = vmatpush.msra.mxu0 0.0
        %660 = vmatpush.msra.mxu0 0.0
        %661 = vmatpush.msra.mxu0 0.0
        %662 = vmatpush.msra.mxu0 0.0
        %663 = vmatpush.msra.mxu0 0.0
        %664 = vmatpush.msra.mxu0 0.0
        %665 = vmatpush.msra.mxu0 0.0
        %666 = vmatpush.msra.mxu0 %v373
        %667 = vmatpush.msra.mxu0 %v372
        %668 = vmatpush.msra.mxu0 %v371
        %669 = vmatpush.msra.mxu0 %v370
        %670 = vmatmul.f32.gmra.mxu0 %v652
        %v671 = vpop.f32.mrf.mxu0
        %v672 = vadd.f32 0.0, %v671
        %673 = vdwg.mxu0
        %v674 = vadd.f32 %v651, %v672
        %v675 = vtanh.pop %v674
        %v676 = vadd.f32 %v675, 1.0
        %v677 = vmul.f32 %v676, 0.5
        %v678 = vmul.f32 %v677, %v639
        %680 = vrot.lane.b32.xlu0 %v675, 32
        %v681 = vpop.permute.xlu0 %680
        %v683 = vmul.f32 %v677, %v681
        %685 = vrot.lane.b32.xlu0 %v683, 32
        %v686 = vpop.permute.xlu0 %685
        %v688 = vadd.f32 %v678, %v686
        %v689 = vtanh.pop %v688
        %691 = vrot.lane.b32.xlu0 %v689, 32
        %v692 = vpop.permute.xlu0 %691
        %v694 = vmul.f32 %v677, %v692
        %696 = vrot.lane.b32.xlu0 %v694, 64
        %v697 = vpop.permute.xlu0 %696
        %699 = vst.msk [vmem:[#allocation2 + $0x5] sm:$0x1] %vm453, %v697
        %v700 = vld [vmem:[#allocation3 + $0x6] sm:$0x1]
        %v701 = vsel %vm379, %v697, 0
        %703 = vmatpush.msra.mxu0 0.0
        %704 = vmatpush.msra.mxu0 0.0
        %705 = vmatpush.msra.mxu0 0.0
        %706 = vmatpush.msra.mxu0 0.0
        %707 = vmatpush.msra.mxu0 0.0
        %708 = vmatpush.msra.mxu0 0.0
        %709 = vmatpush.msra.mxu0 0.0
        %710 = vmatpush.msra.mxu0 0.0
        %711 = vmatpush.msra.mxu0 0.0
        %712 = vmatpush.msra.mxu0 0.0
        %713 = vmatpush.msra.mxu0 0.0
        %714 = vmatpush.msra.mxu0 0.0
        %715 = vmatpush.msra.mxu0 %v373
        %716 = vmatpush.msra.mxu0 %v372
        %717 = vmatpush.msra.mxu0 %v371
        %718 = vmatpush.msra.mxu0 %v370
        %719 = vmatmul.f32.gmra.mxu0 %v701
        %v720 = vpop.f32.mrf.mxu0
        %v721 = vadd.f32 0.0, %v720
        %722 = vdwg.mxu0
        %v723 = vadd.f32 %v700, %v721
        %v724 = vtanh.pop %v723
        %v725 = vadd.f32 %v724, 1.0
        %v726 = vmul.f32 %v725, 0.5
        %v727 = vmul.f32 %v726, %v688
        %729 = vrot.lane.b32.xlu0 %v724, 32
        %v730 = vpop.permute.xlu0 %729
        %v732 = vmul.f32 %v726, %v730
        %734 = vrot.lane.b32.xlu0 %v732, 32
        %v735 = vpop.permute.xlu0 %734
        %v737 = vadd.f32 %v727, %v735
        %v738 = vtanh.pop %v737
        %740 = vrot.lane.b32.xlu0 %v738, 32
        %v741 = vpop.permute.xlu0 %740
        %v743 = vmul.f32 %v726, %v741
        %745 = vrot.lane.b32.xlu0 %v743, 64
        %v746 = vpop.permute.xlu0 %745
        %748 = vst.msk [vmem:[#allocation2 + $0x6] sm:$0x1] %vm453, %v746
        %v749 = vld [vmem:[#allocation3 + $0x7] sm:$0x1]
        %v750 = vsel %vm379, %v746, 0
        %752 = vmatpush.msra.mxu0 0.0
        %753 = vmatpush.msra.mxu0 0.0
        %754 = vmatpush.msra.mxu0 0.0
        %755 = vmatpush.msra.mxu0 0.0
        %756 = vmatpush.msra.mxu0 0.0
        %757 = vmatpush.msra.mxu0 0.0
        %758 = vmatpush.msra.mxu0 0.0
        %759 = vmatpush.msra.mxu0 0.0
        %760 = vmatpush.msra.mxu0 0.0
        %761 = vmatpush.msra.mxu0 0.0
        %762 = vmatpush.msra.mxu0 0.0
        %763 = vmatpush.msra.mxu0 0.0
        %764 = vmatpush.msra.mxu0 %v373
        %765 = vmatpush.msra.mxu0 %v372
        %766 = vmatpush.msra.mxu0 %v371
        %767 = vmatpush.msra.mxu0 %v370
        %768 = vmatmul.f32.gmra.mxu0 %v750
        %v769 = vpop.f32.mrf.mxu0
        %v770 = vadd.f32 0.0, %v769
        %771 = vdwg.mxu0
        %v772 = vadd.f32 %v749, %v770
        %v773 = vtanh.pop %v772
        %v774 = vadd.f32 %v773, 1.0
        %v775 = vmul.f32 %v774, 0.5
        %v776 = vmul.f32 %v775, %v737
        %778 = vrot.lane.b32.xlu0 %v773, 32
        %v779 = vpop.permute.xlu0 %778
        %v781 = vmul.f32 %v775, %v779
        %783 = vrot.lane.b32.xlu0 %v781, 32
        %v784 = vpop.permute.xlu0 %783
        %v786 = vadd.f32 %v776, %v784
        %v787 = vtanh.pop %v786
        %789 = vrot.lane.b32.xlu0 %v787, 32
        %v790 = vpop.permute.xlu0 %789
        %v792 = vmul.f32 %v775, %v790
        %794 = vrot.lane.b32.xlu0 %v792, 64
        %v795 = vpop.permute.xlu0 %794
        %797 = vst.msk [vmem:[#allocation2 + $0x7] sm:$0x1] %vm453, %v795
        %p798 = scmp.eq.s32.totalorder %s33, 1
        // Predicated region
        $region53: #{tpu_custom_call.1} parent=43 // pred_check
          %p799 = pneg %p798
        $region54: #{tpu_custom_call.1} parent=43 // pred_check_branch
          %801 = sbr.rel (%p799) target = $region56
        $region55: #{tpu_custom_call.1} parent=43 // pred_region
          %v802 = vld [vmem:[#allocation2] sm:$0xff]
          %803 = vst.msk [vmem:[#allocation10] sm:$0xff] %vm379, %v802
          %v804 = vld [vmem:[%s5] sm:$0xff]
          %v805 = vld [vmem:[%s5 + $0x8] sm:$0xff]
          %v806 = vld [vmem:[%s5 + $0x10] sm:$0xff]
          %v807 = vld [vmem:[%s5 + $0x18] sm:$0xff]
          %v808 = vld [vmem:[%s6] sm:$0x1]
          %v810 = vperm.slane %v808, 0
          %v813 = vsel %vm379, %v802, 0
          %815 = vmatpush.msra.mxu0 0.0
          %816 = vmatpush.msra.mxu0 0.0
          %817 = vmatpush.msra.mxu0 0.0
          %818 = vmatpush.msra.mxu0 0.0
          %819 = vmatpush.msra.mxu0 0.0
          %820 = vmatpush.msra.mxu0 0.0
          %821 = vmatpush.msra.mxu0 0.0
          %822 = vmatpush.msra.mxu0 0.0
          %823 = vmatpush.msra.mxu0 0.0
          %824 = vmatpush.msra.mxu0 0.0
          %825 = vmatpush.msra.mxu0 0.0
          %826 = vmatpush.msra.mxu0 0.0
          %827 = vmatpush.msra.mxu0 %v807
          %828 = vmatpush.msra.mxu0 %v806
          %829 = vmatpush.msra.mxu0 %v805
          %830 = vmatpush.msra.mxu0 %v804
          %831 = vmatmul.f32.gmra.mxu0 %v813
          %v832 = vpop.f32.mrf.mxu0
          %v833 = vadd.f32 %v810, %v832
          %834 = vdwg.mxu0
          %835 = vst [vmem:[#allocation9] sm:$0xff] %v833
        $region56: #{tpu_custom_call.1} parent=43 // pred_fallthru
          _
        // Predicated region
        $region57: #{tpu_custom_call.1} parent=43 // pred_check
          %p836 = pneg %p187
        $region58: #{tpu_custom_call.1} parent=43 // pred_check_branch
          %838 = sbr.rel (%p836) target = $region60
        $region59: #{tpu_custom_call.1} parent=43 // pred_region
          %840 = vsyncadd [#allocation8], 0
          %s842 = sshll.u32 [#allocation9], 4
          %s843 = int_to_ptr.vmem [resolvable:$true] %s842
          %s844 = sshll.u32 %s7, 4
          %s845 = int_to_ptr.hbm [resolvable:$true] %s844
          %847 = dma.vmem_to_hbm [thread:$0]  %s843, 128, %s845, [#allocation8]
        $region60: #{tpu_custom_call.1} parent=43 // pred_fallthru
          _
        // Predicated region
        $region61: #{tpu_custom_call.1} parent=43 // pred_check
          %p848 = pneg %p208
        $region62: #{tpu_custom_call.1} parent=43 // pred_check_branch
          %850 = sbr.rel (%p848) target = $region64
        $region63: #{tpu_custom_call.1} parent=43 // pred_region
          %852 = vsyncadd [#allocation11], 0
          %s854 = sshll.u32 [#allocation10], 4
          %s855 = int_to_ptr.vmem [resolvable:$true] %s854
          %s856 = sshll.u32 %s8, 4
          %s857 = int_to_ptr.hbm [resolvable:$true] %s856
          %859 = dma.vmem_to_hbm [thread:$0]  %s855, 128, %s857, [#allocation11]
        $region64: #{tpu_custom_call.1} parent=43 // pred_fallthru
          _
        // Predicated region
        $region65: #{tpu_custom_call.1} parent=43 // pred_check
          %p860 = pneg %p187
        $region66: #{tpu_custom_call.1} parent=43 // pred_check_branch
          %862 = sbr.rel (%p860) target = $region68
        $region67: #{tpu_custom_call.1} parent=43 // pred_region
          %864 = dma.done [#allocation8], 128
        $region68: #{tpu_custom_call.1} parent=43 // pred_fallthru
          _
        // Predicated region
        $region69: #{tpu_custom_call.1} parent=43 // pred_check
          %p865 = pneg %p208
        $region70: #{tpu_custom_call.1} parent=43 // pred_check_branch
          %867 = sbr.rel (%p865) target = $region72
        $region71: #{tpu_custom_call.1} parent=43 // pred_region
          %869 = dma.done [#allocation11], 128
        $region72: #{tpu_custom_call.1} parent=43 // pred_fallthru
          _
      $region44: #{tpu_custom_call.1} parent=5 // pred_fallthru
        _
      %p870 = scmp.le.s32.totalorder 2, %s28
      // Predicated region
      $region73: #{tpu_custom_call.1} parent=5 // pred_check
        %p871 = pneg %p870
      $region74: #{tpu_custom_call.1} parent=5 // pred_check_branch
        %873 = sbr.rel (%p871) target = $region76
      $region75: #{tpu_custom_call.1} parent=5 // pred_region
        %s874 = ssub.s32 %s28, 2
      $region76: #{tpu_custom_call.1} parent=5 // pred_fallthru
        _
    $region6: #{tpu_custom_call.1} parent=1 // loop_footer
      %s32 = sadd.s32 1, %s28
    $region7: #{tpu_custom_call.1} parent=1 // loop_footer_branch
      %27 = sbr.rel target = $region3
    $region8: #{tpu_custom_call.1} parent=1 // loop_exit
      _
    %875 = vsyncpa [#allocation7], 1
    %s876 = scalar_lea.sflag [#allocation7], 1
    %877 = vsyncpa %s876, 1
    %878 = vsyncpa [#allocation8], 1
    %s879 = scalar_lea.sflag [#allocation8], 1
    %880 = vsyncpa %s879, 1
    %881 = vsyncpa [#allocation11], 1

</llo_original>
